<compile_context>
chip_gen: v5e
topology: v5e:2x2
jax: 0.10.0
libtpu: 0.0.40
codegen_flags: <defaults>
</compile_context>

<pallas_src>
import functools

import jax
import jax.numpy as jnp
from jax.experimental import pallas as pl
from jax.experimental.pallas import tpu as pltpu


def _fused_lstm2_kernel(x_ref, wih0_ref, whh0_ref, b0_ref,
                        wih1_ref, whh1_ref, b1_ref,
                        hseq_ref, hn_ref, cn_ref,
                        xp_scr, h0_scr,
                        *, S, B, H, unroll):
    """Fused 2-layer LSTM over the full sequence in a single grid step.

    x_ref    : (S*B, D)   time-major flattened input (row = t*B + b), bf16
    wih*_ref : (D|H, 4H)  input-to-hidden weights, pre-transposed, bf16
    whh*_ref : (H, 4H)    hidden-to-hidden weights, pre-transposed, bf16
    b*_ref   : (1, 4H)    combined bias (b_ih + b_hh), f32
    hseq_ref : (S, B, H)  layer-1 hidden sequence (output), f32
    hn_ref   : (2, B, H)  final hidden states per layer (output), f32
    cn_ref   : (2, B, H)  final cell states per layer (output), f32
    xp_scr   : (S*B, 4H)  VMEM f32: hoisted input projections (reused by both layers)
    h0_scr   : (S*B, H)   VMEM f32: layer-0 hidden sequence
    """

    def cell(gates, c_prev):
        # PyTorch gate order i, f, g, o; all gate math in f32.
        # TODO(synk): for H that is not a multiple of 128, these slices are
        # sub-lane-range; a lane-dense (4, B, Hpad) gate layout would remove
        # the per-step lane selects (not worth 4x MXU columns at H=32).
        i_g = jax.nn.sigmoid(gates[:, 0 * H:1 * H])
        f_g = jax.nn.sigmoid(gates[:, 1 * H:2 * H])
        g_g = jnp.tanh(gates[:, 2 * H:3 * H])
        o_g = jax.nn.sigmoid(gates[:, 3 * H:4 * H])
        c_new = f_g * c_prev + i_g * g_g
        h_new = o_g * jnp.tanh(c_new)
        return h_new, c_new

    zero = jnp.zeros((B, H), dtype=jnp.float32)

    # ---- Phase 1: layer-0 input projection for ALL timesteps ----
    # One bf16 MXU matmul with f32 accumulation, one bulk VMEM store.
    xp_scr[...] = (jnp.dot(x_ref[...], wih0_ref[...],
                           preferred_element_type=jnp.float32) + b0_ref[...])

    # ---- Phase 2: layer-0 recurrence (only h @ W_hh^T on the serial path) ----
    whh0 = whh0_ref[...]

    def body0(t, carry):
        h_prev, c_prev = carry
        row = pl.multiple_of(t * B, B)
        gates = xp_scr[pl.ds(row, B), :] + jnp.dot(
            h_prev.astype(jnp.bfloat16), whh0, preferred_element_type=jnp.float32)
        h_new, c_new = cell(gates, c_prev)
        h0_scr[pl.ds(row, B), :] = h_new
        return (h_new, c_new)

    h0_n, c0_n = jax.lax.fori_loop(0, S, body0, (zero, zero), unroll=unroll)

    # ---- Phase 3: layer-1 input projection over the full layer-0 sequence ----
    # Reuses xp_scr: the layer-0 projections are dead once the loop finished,
    # and the data dependence on h0_scr keeps this store ordered after it.
    xp_scr[...] = (jnp.dot(h0_scr[...].astype(jnp.bfloat16), wih1_ref[...],
                           preferred_element_type=jnp.float32) + b1_ref[...])

    # ---- Phase 4: layer-1 recurrence, h written into the resident output ----
    whh1 = whh1_ref[...]

    def body1(t, carry):
        h_prev, c_prev = carry
        row = pl.multiple_of(t * B, B)
        gates = xp_scr[pl.ds(row, B), :] + jnp.dot(
            h_prev.astype(jnp.bfloat16), whh1, preferred_element_type=jnp.float32)
        h_new, c_new = cell(gates, c_prev)
        hseq_ref[t] = h_new
        return (h_new, c_new)

    h1_n, c1_n = jax.lax.fori_loop(0, S, body1, (zero, zero), unroll=unroll)

    # ---- Phase 5: final states, written exactly once ----
    hn_ref[0] = h0_n
    hn_ref[1] = h1_n
    cn_ref[0] = c0_n
    cn_ref[1] = c1_n


def encoder_rnn_forward(z_seq, params):
    """EncoderRNN.forward.

    z_seq : (B, S, latent_dim) float32, batch_first like the PyTorch module.
    params: list of 2 per-layer dicts with keys w_ih, w_hh, b_ih, b_hh.
    Returns (h_seq (B,S,H), (h_n (2,B,H), c_n (2,B,H))).
    """
    assert len(params) == 2, "fused kernel is specialized to num_layers=2"
    B, S, D = z_seq.shape
    H = params[0]["w_hh"].shape[1]

    # Pad batch to a sublane multiple (8): every (B, H) tile in the serial
    # recurrence becomes vreg-aligned; padded rows are sliced off afterwards.
    Bp = ((B + 7) // 8) * 8

    # Time-major + flatten so each layer's hoisted input projection is one 2D
    # MXU matmul.  Operands cast to bf16 (f32 accumulation inside the kernel).
    x_tm = jnp.transpose(z_seq, (1, 0, 2)).astype(jnp.float32)       # (S, B, D)
    if Bp != B:
        x_tm = jnp.pad(x_tm, ((0, 0), (0, Bp - B), (0, 0)))
    x2 = x_tm.reshape(S * Bp, D).astype(jnp.bfloat16)

    l0, l1 = params
    wih0 = jnp.transpose(l0["w_ih"]).astype(jnp.bfloat16)            # (D, 4H)
    whh0 = jnp.transpose(l0["w_hh"]).astype(jnp.bfloat16)            # (H, 4H)
    b0 = (l0["b_ih"] + l0["b_hh"]).reshape(1, 4 * H).astype(jnp.float32)
    wih1 = jnp.transpose(l1["w_ih"]).astype(jnp.bfloat16)            # (H, 4H)
    whh1 = jnp.transpose(l1["w_hh"]).astype(jnp.bfloat16)            # (H, 4H)
    b1 = (l1["b_ih"] + l1["b_hh"]).reshape(1, 4 * H).astype(jnp.float32)

    # Full unroll only for short sequences; partial unroll avoids vreg spills.
    unroll = True if S <= 16 else 8

    kernel = functools.partial(_fused_lstm2_kernel, S=S, B=Bp, H=H, unroll=unroll)

    grid_spec = pltpu.PrefetchScalarGridSpec(
        num_scalar_prefetch=0,
        grid=(1,),                                  # time loop is in-kernel
        in_specs=[
            pl.BlockSpec((S * Bp, D), lambda i: (0, 0)),     # x (all timesteps)
            pl.BlockSpec((D, 4 * H), lambda i: (0, 0)),      # W_ih^T layer 0
            pl.BlockSpec((H, 4 * H), lambda i: (0, 0)),      # W_hh^T layer 0
            pl.BlockSpec((1, 4 * H), lambda i: (0, 0)),      # bias   layer 0
            pl.BlockSpec((H, 4 * H), lambda i: (0, 0)),      # W_ih^T layer 1
            pl.BlockSpec((H, 4 * H), lambda i: (0, 0)),      # W_hh^T layer 1
            pl.BlockSpec((1, 4 * H), lambda i: (0, 0)),      # bias   layer 1
        ],
        out_specs=[
            pl.BlockSpec((S, Bp, H), lambda i: (0, 0, 0)),   # h_seq (layer 1)
            pl.BlockSpec((2, Bp, H), lambda i: (0, 0, 0)),   # h_n
            pl.BlockSpec((2, Bp, H), lambda i: (0, 0, 0)),   # c_n
        ],
        scratch_shapes=[
            pltpu.VMEM((S * Bp, 4 * H), jnp.float32),        # projections (shared by both layers)
            pltpu.VMEM((S * Bp, H), jnp.float32),            # layer-0 hidden sequence
        ],
    )

    h_seq_tm, h_n, c_n = pl.pallas_call(
        kernel,
        grid_spec=grid_spec,
        out_shape=(
            jax.ShapeDtypeStruct((S, Bp, H), jnp.float32),
            jax.ShapeDtypeStruct((2, Bp, H), jnp.float32),
            jax.ShapeDtypeStruct((2, Bp, H), jnp.float32),
        ),
        compiler_params=pltpu.CompilerParams(
            dimension_semantics=("arbitrary",),
            vmem_limit_bytes=32 * 1024 * 1024,
        ),
    )(x2, wih0, whh0, b0, wih1, whh1, b1)

    h_seq = jnp.transpose(h_seq_tm[:, :B, :], (1, 0, 2))             # (B, S, H)
    return h_seq, (h_n[:, :B, :], c_n[:, :B, :])


def init_params(key, latent_dim, hidden_dim, num_layers):
    """Deterministic init mirroring nn.LSTM parameter shapes
    (uniform(-1/sqrt(H), 1/sqrt(H)), gate order i,f,g,o)."""
    bound = 1.0 / (hidden_dim ** 0.5)
    params = []
    for layer in range(num_layers):
        in_dim = latent_dim if layer == 0 else hidden_dim
        key, k1, k2, k3, k4 = jax.random.split(key, 5)
        params.append(dict(
            w_ih=jax.random.uniform(k1, (4 * hidden_dim, in_dim),
                                    minval=-bound, maxval=bound, dtype=jnp.float32),
            w_hh=jax.random.uniform(k2, (4 * hidden_dim, hidden_dim),
                                    minval=-bound, maxval=bound, dtype=jnp.float32),
            b_ih=jax.random.uniform(k3, (4 * hidden_dim,),
                                    minval=-bound, maxval=bound, dtype=jnp.float32),
            b_hh=jax.random.uniform(k4, (4 * hidden_dim,),
                                    minval=-bound, maxval=bound, dtype=jnp.float32),
        ))
    return params


def _reference_lstm(z_seq, params):
    """Pure-JAX f32 reference (lax.scan) for the correctness check."""
    x = jnp.transpose(z_seq, (1, 0, 2))  # (S, B, D)
    h_ns, c_ns = [], []
    for layer in params:
        w_ih, w_hh = layer["w_ih"], layer["w_hh"]
        b = (layer["b_ih"] + layer["b_hh"])[None, :]
        B = x.shape[1]
        H = w_hh.shape[1]

        def step(carry, x_t):
            h, c = carry
            gates = x_t @ w_ih.T + h @ w_hh.T + b
            i = jax.nn.sigmoid(gates[:, 0 * H:1 * H])
            f = jax.nn.sigmoid(gates[:, 1 * H:2 * H])
            g = jnp.tanh(gates[:, 2 * H:3 * H])
            o = jax.nn.sigmoid(gates[:, 3 * H:4 * H])
            c_new = f * c + i * g
            h_new = o * jnp.tanh(c_new)
            return (h_new, c_new), h_new

        init = (jnp.zeros((B, H), jnp.float32), jnp.zeros((B, H), jnp.float32))
        (h_n, c_n), h_seq = jax.lax.scan(step, init, x)
        x = h_seq
        h_ns.append(h_n)
        c_ns.append(c_n)
    return (jnp.transpose(x, (1, 0, 2)),
            (jnp.stack(h_ns, 0), jnp.stack(c_ns, 0)))


if __name__ == "__main__":
    latent_dim, hidden_dim, num_layers = 32, 32, 2
    batch, seq = 2, 8

    key = jax.random.PRNGKey(0)
    key_p, key_x = jax.random.split(key)
    params = init_params(key_p, latent_dim, hidden_dim, num_layers)
    z_seq = jax.random.normal(key_x, (batch, seq, latent_dim), dtype=jnp.float32)

    h_seq, (h_n, c_n) = encoder_rnn_forward(z_seq, params)
    jax.block_until_ready((h_seq, h_n, c_n))

    # Sanity check vs pure-JAX f32 reference (kernel uses bf16 MXU operands
    # with f32 accumulation, so tolerance is bf16-level).
    h_seq_ref, (h_n_ref, c_n_ref) = _reference_lstm(z_seq, params)
    assert h_seq.shape == (batch, seq, hidden_dim)
    assert h_n.shape == (num_layers, batch, hidden_dim)
    assert c_n.shape == (num_layers, batch, hidden_dim)
    assert jnp.allclose(h_seq, h_seq_ref, atol=5e-2)
    assert jnp.allclose(h_n, h_n_ref, atol=5e-2)
    assert jnp.allclose(c_n, c_n_ref, atol=5e-2)

    print("KERNEL_OK")
</pallas_src>

<mosaic_0001>
module attributes {stable_mosaic.version = 11 : i64} {
  func.func @_fused_lstm2_kernel(%arg0: i32, %arg1: memref<64x32xbf16, #tpu.memory_space<vmem>>, %arg2: memref<32x128xbf16, #tpu.memory_space<vmem>>, %arg3: memref<32x128xbf16, #tpu.memory_space<vmem>>, %arg4: memref<1x128xf32, #tpu.memory_space<vmem>>, %arg5: memref<32x128xbf16, #tpu.memory_space<vmem>>, %arg6: memref<32x128xbf16, #tpu.memory_space<vmem>>, %arg7: memref<1x128xf32, #tpu.memory_space<vmem>>, %arg8: memref<8x8x32xf32, #tpu.memory_space<vmem>>, %arg9: memref<2x8x32xf32, #tpu.memory_space<vmem>>, %arg10: memref<2x8x32xf32, #tpu.memory_space<vmem>>, %arg11: memref<64x128xf32, #tpu.memory_space<vmem>>, %arg12: memref<64x32xf32, #tpu.memory_space<vmem>>) attributes {dimension_semantics = [#tpu.dimension_semantics<arbitrary>], iteration_bounds = array<i64: 1>, scalar_prefetch = 0 : i64, scratch_operands = 2 : i64, tpu.core_type = #tpu.core_type<tc>, window_params = [{pipeline_mode = #tpu.pipeline_mode<synchronous>, transform_indices = @transform_0, window_bounds = array<i64: 64, 32>}, {pipeline_mode = #tpu.pipeline_mode<synchronous>, transform_indices = @transform_1, window_bounds = array<i64: 32, 128>}, {pipeline_mode = #tpu.pipeline_mode<synchronous>, transform_indices = @transform_2, window_bounds = array<i64: 32, 128>}, {pipeline_mode = #tpu.pipeline_mode<synchronous>, transform_indices = @transform_3, window_bounds = array<i64: 1, 128>}, {pipeline_mode = #tpu.pipeline_mode<synchronous>, transform_indices = @transform_4, window_bounds = array<i64: 32, 128>}, {pipeline_mode = #tpu.pipeline_mode<synchronous>, transform_indices = @transform_5, window_bounds = array<i64: 32, 128>}, {pipeline_mode = #tpu.pipeline_mode<synchronous>, transform_indices = @transform_6, window_bounds = array<i64: 1, 128>}, {pipeline_mode = #tpu.pipeline_mode<synchronous>, transform_indices = @transform_7, window_bounds = array<i64: 8, 8, 32>}, {pipeline_mode = #tpu.pipeline_mode<synchronous>, transform_indices = @transform_8, window_bounds = array<i64: 2, 8, 32>}, {pipeline_mode = #tpu.pipeline_mode<synchronous>, transform_indices = @transform_9, window_bounds = array<i64: 2, 8, 32>}]} {
    %cst = arith.constant 0.000000e+00 : f32
    %0 = vector.broadcast %cst : f32 to vector<8x32xf32>
    %c0 = arith.constant 0 : index
    %c0_0 = arith.constant 0 : index
    %1 = vector.load %arg1[%c0, %c0_0] : memref<64x32xbf16, #tpu.memory_space<vmem>>, vector<64x32xbf16>
    %c0_1 = arith.constant 0 : index
    %c0_2 = arith.constant 0 : index
    %2 = vector.load %arg2[%c0_1, %c0_2] : memref<32x128xbf16, #tpu.memory_space<vmem>>, vector<32x128xbf16>
    %cst_3 = arith.constant dense<0.000000e+00> : vector<64x128xf32>
    %3 = tpu.matmul %1, %2, %cst_3 {dimension_numbers = #tpu.dot_dimension_numbers<[1], [0], [0], [1], [0, 0, 1, 1], [], []>} : vector<64x32xbf16>, vector<32x128xbf16>, vector<64x128xf32> -> vector<64x128xf32>
    %c0_4 = arith.constant 0 : index
    %c0_5 = arith.constant 0 : index
    %4 = vector.load %arg4[%c0_4, %c0_5] : memref<1x128xf32, #tpu.memory_space<vmem>>, vector<1x128xf32>
    %5 = vector.broadcast %4 : vector<1x128xf32> to vector<64x128xf32>
    %6 = arith.addf %3, %5 : vector<64x128xf32>
    %c0_6 = arith.constant 0 : index
    %c0_7 = arith.constant 0 : index
    %7 = vector.load %arg11[%c0_6, %c0_7] : memref<64x128xf32, #tpu.memory_space<vmem>>, vector<64x128xf32>
    tpu.vector_store %arg11[%c0_6, %c0_7], %6 {strides = array<i32>} : memref<64x128xf32, #tpu.memory_space<vmem>>, vector<64x128xf32>,
    %c0_8 = arith.constant 0 : index
    %c0_9 = arith.constant 0 : index
    %8 = vector.load %arg3[%c0_8, %c0_9] : memref<32x128xbf16, #tpu.memory_space<vmem>>, vector<32x128xbf16>
    %c0_i32 = arith.constant 0 : i32
    %c8_i32 = arith.constant 8 : i32
    %9 = arith.muli %c0_i32, %c8_i32 : i32
    %10 = tpu.assume_multiple %9, 8 : i32
    %11 = arith.index_cast %10 : i32 to index
    %c0_10 = arith.constant 0 : index
    %12 = vector.load %arg11[%11, %c0_10] : memref<64x128xf32, #tpu.memory_space<vmem>>, vector<8x128xf32>
    %13 = arith.truncf %0 : vector<8x32xf32> to vector<8x32xbf16>
    %cst_11 = arith.constant dense<0.000000e+00> : vector<8x128xf32>
    %14 = tpu.matmul %13, %8, %cst_11 {dimension_numbers = #tpu.dot_dimension_numbers<[1], [0], [0], [1], [0, 0, 1, 1], [], []>} : vector<8x32xbf16>, vector<32x128xbf16>, vector<8x128xf32> -> vector<8x128xf32>
    %15 = arith.addf %12, %14 : vector<8x128xf32>
    %16 = vector.extract_strided_slice %15 {offsets = [0, 0], sizes = [8, 32], strides = [1, 1]} : vector<8x128xf32> to vector<8x32xf32>
    %17 = arith.negf %16 : vector<8x32xf32>
    %18 = math.exp %17 : vector<8x32xf32>
    %cst_12 = arith.constant 1.000000e+00 : f32
    %19 = vector.broadcast %cst_12 : f32 to vector<8x32xf32>
    %20 = arith.addf %19, %18 : vector<8x32xf32>
    %21 = arith.divf %19, %20 : vector<8x32xf32>
    %22 = vector.extract_strided_slice %15 {offsets = [0, 32], sizes = [8, 32], strides = [1, 1]} : vector<8x128xf32> to vector<8x32xf32>
    %23 = arith.negf %22 : vector<8x32xf32>
    %24 = math.exp %23 : vector<8x32xf32>
    %cst_13 = arith.constant 1.000000e+00 : f32
    %25 = vector.broadcast %cst_13 : f32 to vector<8x32xf32>
    %26 = arith.addf %25, %24 : vector<8x32xf32>
    %27 = arith.divf %25, %26 : vector<8x32xf32>
    %28 = vector.extract_strided_slice %15 {offsets = [0, 64], sizes = [8, 32], strides = [1, 1]} : vector<8x128xf32> to vector<8x32xf32>
    %29 = math.tanh %28 : vector<8x32xf32>
    %30 = vector.extract_strided_slice %15 {offsets = [0, 96], sizes = [8, 32], strides = [1, 1]} : vector<8x128xf32> to vector<8x32xf32>
    %31 = arith.negf %30 : vector<8x32xf32>
    %32 = math.exp %31 : vector<8x32xf32>
    %cst_14 = arith.constant 1.000000e+00 : f32
    %33 = vector.broadcast %cst_14 : f32 to vector<8x32xf32>
    %34 = arith.addf %33, %32 : vector<8x32xf32>
    %35 = arith.divf %33, %34 : vector<8x32xf32>
    %36 = arith.mulf %27, %0 : vector<8x32xf32>
    %37 = arith.mulf %21, %29 : vector<8x32xf32>
    %38 = arith.addf %36, %37 : vector<8x32xf32>
    %39 = math.tanh %38 : vector<8x32xf32>
    %40 = arith.mulf %35, %39 : vector<8x32xf32>
    %41 = arith.index_cast %10 : i32 to index
    %c0_15 = arith.constant 0 : index
    %42 = vector.load %arg12[%41, %c0_15] : memref<64x32xf32, #tpu.memory_space<vmem>>, vector<8x32xf32>
    tpu.vector_store %arg12[%41, %c0_15], %40 {strides = array<i32>} : memref<64x32xf32, #tpu.memory_space<vmem>>, vector<8x32xf32>,
    %c1_i32 = arith.constant 1 : i32
    %c8_i32_16 = arith.constant 8 : i32
    %43 = arith.muli %c1_i32, %c8_i32_16 : i32
    %44 = tpu.assume_multiple %43, 8 : i32
    %45 = arith.index_cast %44 : i32 to index
    %c0_17 = arith.constant 0 : index
    %46 = vector.load %arg11[%45, %c0_17] : memref<64x128xf32, #tpu.memory_space<vmem>>, vector<8x128xf32>
    %47 = arith.truncf %40 : vector<8x32xf32> to vector<8x32xbf16>
    %cst_18 = arith.constant dense<0.000000e+00> : vector<8x128xf32>
    %48 = tpu.matmul %47, %8, %cst_18 {dimension_numbers = #tpu.dot_dimension_numbers<[1], [0], [0], [1], [0, 0, 1, 1], [], []>} : vector<8x32xbf16>, vector<32x128xbf16>, vector<8x128xf32> -> vector<8x128xf32>
    %49 = arith.addf %46, %48 : vector<8x128xf32>
    %50 = vector.extract_strided_slice %49 {offsets = [0, 0], sizes = [8, 32], strides = [1, 1]} : vector<8x128xf32> to vector<8x32xf32>
    %51 = arith.negf %50 : vector<8x32xf32>
    %52 = math.exp %51 : vector<8x32xf32>
    %cst_19 = arith.constant 1.000000e+00 : f32
    %53 = vector.broadcast %cst_19 : f32 to vector<8x32xf32>
    %54 = arith.addf %53, %52 : vector<8x32xf32>
    %55 = arith.divf %53, %54 : vector<8x32xf32>
    %56 = vector.extract_strided_slice %49 {offsets = [0, 32], sizes = [8, 32], strides = [1, 1]} : vector<8x128xf32> to vector<8x32xf32>
    %57 = arith.negf %56 : vector<8x32xf32>
    %58 = math.exp %57 : vector<8x32xf32>
    %cst_20 = arith.constant 1.000000e+00 : f32
    %59 = vector.broadcast %cst_20 : f32 to vector<8x32xf32>
    %60 = arith.addf %59, %58 : vector<8x32xf32>
    %61 = arith.divf %59, %60 : vector<8x32xf32>
    %62 = vector.extract_strided_slice %49 {offsets = [0, 64], sizes = [8, 32], strides = [1, 1]} : vector<8x128xf32> to vector<8x32xf32>
    %63 = math.tanh %62 : vector<8x32xf32>
    %64 = vector.extract_strided_slice %49 {offsets = [0, 96], sizes = [8, 32], strides = [1, 1]} : vector<8x128xf32> to vector<8x32xf32>
    %65 = arith.negf %64 : vector<8x32xf32>
    %66 = math.exp %65 : vector<8x32xf32>
    %cst_21 = arith.constant 1.000000e+00 : f32
    %67 = vector.broadcast %cst_21 : f32 to vector<8x32xf32>
    %68 = arith.addf %67, %66 : vector<8x32xf32>
    %69 = arith.divf %67, %68 : vector<8x32xf32>
    %70 = arith.mulf %61, %38 : vector<8x32xf32>
    %71 = arith.mulf %55, %63 : vector<8x32xf32>
    %72 = arith.addf %70, %71 : vector<8x32xf32>
    %73 = math.tanh %72 : vector<8x32xf32>
    %74 = arith.mulf %69, %73 : vector<8x32xf32>
    %75 = arith.index_cast %44 : i32 to index
    %c0_22 = arith.constant 0 : index
    %76 = vector.load %arg12[%75, %c0_22] : memref<64x32xf32, #tpu.memory_space<vmem>>, vector<8x32xf32>
    tpu.vector_store %arg12[%75, %c0_22], %74 {strides = array<i32>} : memref<64x32xf32, #tpu.memory_space<vmem>>, vector<8x32xf32>,
    %c2_i32 = arith.constant 2 : i32
    %c8_i32_23 = arith.constant 8 : i32
    %77 = arith.muli %c2_i32, %c8_i32_23 : i32
    %78 = tpu.assume_multiple %77, 8 : i32
    %79 = arith.index_cast %78 : i32 to index
    %c0_24 = arith.constant 0 : index
    %80 = vector.load %arg11[%79, %c0_24] : memref<64x128xf32, #tpu.memory_space<vmem>>, vector<8x128xf32>
    %81 = arith.truncf %74 : vector<8x32xf32> to vector<8x32xbf16>
    %cst_25 = arith.constant dense<0.000000e+00> : vector<8x128xf32>
    %82 = tpu.matmul %81, %8, %cst_25 {dimension_numbers = #tpu.dot_dimension_numbers<[1], [0], [0], [1], [0, 0, 1, 1], [], []>} : vector<8x32xbf16>, vector<32x128xbf16>, vector<8x128xf32> -> vector<8x128xf32>
    %83 = arith.addf %80, %82 : vector<8x128xf32>
    %84 = vector.extract_strided_slice %83 {offsets = [0, 0], sizes = [8, 32], strides = [1, 1]} : vector<8x128xf32> to vector<8x32xf32>
    %85 = arith.negf %84 : vector<8x32xf32>
    %86 = math.exp %85 : vector<8x32xf32>
    %cst_26 = arith.constant 1.000000e+00 : f32
    %87 = vector.broadcast %cst_26 : f32 to vector<8x32xf32>
    %88 = arith.addf %87, %86 : vector<8x32xf32>
    %89 = arith.divf %87, %88 : vector<8x32xf32>
    %90 = vector.extract_strided_slice %83 {offsets = [0, 32], sizes = [8, 32], strides = [1, 1]} : vector<8x128xf32> to vector<8x32xf32>
    %91 = arith.negf %90 : vector<8x32xf32>
    %92 = math.exp %91 : vector<8x32xf32>
    %cst_27 = arith.constant 1.000000e+00 : f32
    %93 = vector.broadcast %cst_27 : f32 to vector<8x32xf32>
    %94 = arith.addf %93, %92 : vector<8x32xf32>
    %95 = arith.divf %93, %94 : vector<8x32xf32>
    %96 = vector.extract_strided_slice %83 {offsets = [0, 64], sizes = [8, 32], strides = [1, 1]} : vector<8x128xf32> to vector<8x32xf32>
    %97 = math.tanh %96 : vector<8x32xf32>
    %98 = vector.extract_strided_slice %83 {offsets = [0, 96], sizes = [8, 32], strides = [1, 1]} : vector<8x128xf32> to vector<8x32xf32>
    %99 = arith.negf %98 : vector<8x32xf32>
    %100 = math.exp %99 : vector<8x32xf32>
    %cst_28 = arith.constant 1.000000e+00 : f32
    %101 = vector.broadcast %cst_28 : f32 to vector<8x32xf32>
    %102 = arith.addf %101, %100 : vector<8x32xf32>
    %103 = arith.divf %101, %102 : vector<8x32xf32>
    %104 = arith.mulf %95, %72 : vector<8x32xf32>
    %105 = arith.mulf %89, %97 : vector<8x32xf32>
    %106 = arith.addf %104, %105 : vector<8x32xf32>
    %107 = math.tanh %106 : vector<8x32xf32>
    %108 = arith.mulf %103, %107 : vector<8x32xf32>
    %109 = arith.index_cast %78 : i32 to index
    %c0_29 = arith.constant 0 : index
    %110 = vector.load %arg12[%109, %c0_29] : memref<64x32xf32, #tpu.memory_space<vmem>>, vector<8x32xf32>
    tpu.vector_store %arg12[%109, %c0_29], %108 {strides = array<i32>} : memref<64x32xf32, #tpu.memory_space<vmem>>, vector<8x32xf32>,
    %c3_i32 = arith.constant 3 : i32
    %c8_i32_30 = arith.constant 8 : i32
    %111 = arith.muli %c3_i32, %c8_i32_30 : i32
    %112 = tpu.assume_multiple %111, 8 : i32
    %113 = arith.index_cast %112 : i32 to index
    %c0_31 = arith.constant 0 : index
    %114 = vector.load %arg11[%113, %c0_31] : memref<64x128xf32, #tpu.memory_space<vmem>>, vector<8x128xf32>
    %115 = arith.truncf %108 : vector<8x32xf32> to vector<8x32xbf16>
    %cst_32 = arith.constant dense<0.000000e+00> : vector<8x128xf32>
    %116 = tpu.matmul %115, %8, %cst_32 {dimension_numbers = #tpu.dot_dimension_numbers<[1], [0], [0], [1], [0, 0, 1, 1], [], []>} : vector<8x32xbf16>, vector<32x128xbf16>, vector<8x128xf32> -> vector<8x128xf32>
    %117 = arith.addf %114, %116 : vector<8x128xf32>
    %118 = vector.extract_strided_slice %117 {offsets = [0, 0], sizes = [8, 32], strides = [1, 1]} : vector<8x128xf32> to vector<8x32xf32>
    %119 = arith.negf %118 : vector<8x32xf32>
    %120 = math.exp %119 : vector<8x32xf32>
    %cst_33 = arith.constant 1.000000e+00 : f32
    %121 = vector.broadcast %cst_33 : f32 to vector<8x32xf32>
    %122 = arith.addf %121, %120 : vector<8x32xf32>
    %123 = arith.divf %121, %122 : vector<8x32xf32>
    %124 = vector.extract_strided_slice %117 {offsets = [0, 32], sizes = [8, 32], strides = [1, 1]} : vector<8x128xf32> to vector<8x32xf32>
    %125 = arith.negf %124 : vector<8x32xf32>
    %126 = math.exp %125 : vector<8x32xf32>
    %cst_34 = arith.constant 1.000000e+00 : f32
    %127 = vector.broadcast %cst_34 : f32 to vector<8x32xf32>
    %128 = arith.addf %127, %126 : vector<8x32xf32>
    %129 = arith.divf %127, %128 : vector<8x32xf32>
    %130 = vector.extract_strided_slice %117 {offsets = [0, 64], sizes = [8, 32], strides = [1, 1]} : vector<8x128xf32> to vector<8x32xf32>
    %131 = math.tanh %130 : vector<8x32xf32>
    %132 = vector.extract_strided_slice %117 {offsets = [0, 96], sizes = [8, 32], strides = [1, 1]} : vector<8x128xf32> to vector<8x32xf32>
    %133 = arith.negf %132 : vector<8x32xf32>
    %134 = math.exp %133 : vector<8x32xf32>
    %cst_35 = arith.constant 1.000000e+00 : f32
    %135 = vector.broadcast %cst_35 : f32 to vector<8x32xf32>
    %136 = arith.addf %135, %134 : vector<8x32xf32>
    %137 = arith.divf %135, %136 : vector<8x32xf32>
    %138 = arith.mulf %129, %106 : vector<8x32xf32>
    %139 = arith.mulf %123, %131 : vector<8x32xf32>
    %140 = arith.addf %138, %139 : vector<8x32xf32>
    %141 = math.tanh %140 : vector<8x32xf32>
    %142 = arith.mulf %137, %141 : vector<8x32xf32>
    %143 = arith.index_cast %112 : i32 to index
    %c0_36 = arith.constant 0 : index
    %144 = vector.load %arg12[%143, %c0_36] : memref<64x32xf32, #tpu.memory_space<vmem>>, vector<8x32xf32>
    tpu.vector_store %arg12[%143, %c0_36], %142 {strides = array<i32>} : memref<64x32xf32, #tpu.memory_space<vmem>>, vector<8x32xf32>,
    %c4_i32 = arith.constant 4 : i32
    %c8_i32_37 = arith.constant 8 : i32
    %145 = arith.muli %c4_i32, %c8_i32_37 : i32
    %146 = tpu.assume_multiple %145, 8 : i32
    %147 = arith.index_cast %146 : i32 to index
    %c0_38 = arith.constant 0 : index
    %148 = vector.load %arg11[%147, %c0_38] : memref<64x128xf32, #tpu.memory_space<vmem>>, vector<8x128xf32>
    %149 = arith.truncf %142 : vector<8x32xf32> to vector<8x32xbf16>
    %cst_39 = arith.constant dense<0.000000e+00> : vector<8x128xf32>
    %150 = tpu.matmul %149, %8, %cst_39 {dimension_numbers = #tpu.dot_dimension_numbers<[1], [0], [0], [1], [0, 0, 1, 1], [], []>} : vector<8x32xbf16>, vector<32x128xbf16>, vector<8x128xf32> -> vector<8x128xf32>
    %151 = arith.addf %148, %150 : vector<8x128xf32>
    %152 = vector.extract_strided_slice %151 {offsets = [0, 0], sizes = [8, 32], strides = [1, 1]} : vector<8x128xf32> to vector<8x32xf32>
    %153 = arith.negf %152 : vector<8x32xf32>
    %154 = math.exp %153 : vector<8x32xf32>
    %cst_40 = arith.constant 1.000000e+00 : f32
    %155 = vector.broadcast %cst_40 : f32 to vector<8x32xf32>
    %156 = arith.addf %155, %154 : vector<8x32xf32>
    %157 = arith.divf %155, %156 : vector<8x32xf32>
    %158 = vector.extract_strided_slice %151 {offsets = [0, 32], sizes = [8, 32], strides = [1, 1]} : vector<8x128xf32> to vector<8x32xf32>
    %159 = arith.negf %158 : vector<8x32xf32>
    %160 = math.exp %159 : vector<8x32xf32>
    %cst_41 = arith.constant 1.000000e+00 : f32
    %161 = vector.broadcast %cst_41 : f32 to vector<8x32xf32>
    %162 = arith.addf %161, %160 : vector<8x32xf32>
    %163 = arith.divf %161, %162 : vector<8x32xf32>
    %164 = vector.extract_strided_slice %151 {offsets = [0, 64], sizes = [8, 32], strides = [1, 1]} : vector<8x128xf32> to vector<8x32xf32>
    %165 = math.tanh %164 : vector<8x32xf32>
    %166 = vector.extract_strided_slice %151 {offsets = [0, 96], sizes = [8, 32], strides = [1, 1]} : vector<8x128xf32> to vector<8x32xf32>
    %167 = arith.negf %166 : vector<8x32xf32>
    %168 = math.exp %167 : vector<8x32xf32>
    %cst_42 = arith.constant 1.000000e+00 : f32
    %169 = vector.broadcast %cst_42 : f32 to vector<8x32xf32>
    %170 = arith.addf %169, %168 : vector<8x32xf32>
    %171 = arith.divf %169, %170 : vector<8x32xf32>
    %172 = arith.mulf %163, %140 : vector<8x32xf32>
    %173 = arith.mulf %157, %165 : vector<8x32xf32>
    %174 = arith.addf %172, %173 : vector<8x32xf32>
    %175 = math.tanh %174 : vector<8x32xf32>
    %176 = arith.mulf %171, %175 : vector<8x32xf32>
    %177 = arith.index_cast %146 : i32 to index
    %c0_43 = arith.constant 0 : index
    %178 = vector.load %arg12[%177, %c0_43] : memref<64x32xf32, #tpu.memory_space<vmem>>, vector<8x32xf32>
    tpu.vector_store %arg12[%177, %c0_43], %176 {strides = array<i32>} : memref<64x32xf32, #tpu.memory_space<vmem>>, vector<8x32xf32>,
    %c5_i32 = arith.constant 5 : i32
    %c8_i32_44 = arith.constant 8 : i32
    %179 = arith.muli %c5_i32, %c8_i32_44 : i32
    %180 = tpu.assume_multiple %179, 8 : i32
    %181 = arith.index_cast %180 : i32 to index
    %c0_45 = arith.constant 0 : index
    %182 = vector.load %arg11[%181, %c0_45] : memref<64x128xf32, #tpu.memory_space<vmem>>, vector<8x128xf32>
    %183 = arith.truncf %176 : vector<8x32xf32> to vector<8x32xbf16>
    %cst_46 = arith.constant dense<0.000000e+00> : vector<8x128xf32>
    %184 = tpu.matmul %183, %8, %cst_46 {dimension_numbers = #tpu.dot_dimension_numbers<[1], [0], [0], [1], [0, 0, 1, 1], [], []>} : vector<8x32xbf16>, vector<32x128xbf16>, vector<8x128xf32> -> vector<8x128xf32>
    %185 = arith.addf %182, %184 : vector<8x128xf32>
    %186 = vector.extract_strided_slice %185 {offsets = [0, 0], sizes = [8, 32], strides = [1, 1]} : vector<8x128xf32> to vector<8x32xf32>
    %187 = arith.negf %186 : vector<8x32xf32>
    %188 = math.exp %187 : vector<8x32xf32>
    %cst_47 = arith.constant 1.000000e+00 : f32
    %189 = vector.broadcast %cst_47 : f32 to vector<8x32xf32>
    %190 = arith.addf %189, %188 : vector<8x32xf32>
    %191 = arith.divf %189, %190 : vector<8x32xf32>
    %192 = vector.extract_strided_slice %185 {offsets = [0, 32], sizes = [8, 32], strides = [1, 1]} : vector<8x128xf32> to vector<8x32xf32>
    %193 = arith.negf %192 : vector<8x32xf32>
    %194 = math.exp %193 : vector<8x32xf32>
    %cst_48 = arith.constant 1.000000e+00 : f32
    %195 = vector.broadcast %cst_48 : f32 to vector<8x32xf32>
    %196 = arith.addf %195, %194 : vector<8x32xf32>
    %197 = arith.divf %195, %196 : vector<8x32xf32>
    %198 = vector.extract_strided_slice %185 {offsets = [0, 64], sizes = [8, 32], strides = [1, 1]} : vector<8x128xf32> to vector<8x32xf32>
    %199 = math.tanh %198 : vector<8x32xf32>
    %200 = vector.extract_strided_slice %185 {offsets = [0, 96], sizes = [8, 32], strides = [1, 1]} : vector<8x128xf32> to vector<8x32xf32>
    %201 = arith.negf %200 : vector<8x32xf32>
    %202 = math.exp %201 : vector<8x32xf32>
    %cst_49 = arith.constant 1.000000e+00 : f32
    %203 = vector.broadcast %cst_49 : f32 to vector<8x32xf32>
    %204 = arith.addf %203, %202 : vector<8x32xf32>
    %205 = arith.divf %203, %204 : vector<8x32xf32>
    %206 = arith.mulf %197, %174 : vector<8x32xf32>
    %207 = arith.mulf %191, %199 : vector<8x32xf32>
    %208 = arith.addf %206, %207 : vector<8x32xf32>
    %209 = math.tanh %208 : vector<8x32xf32>
    %210 = arith.mulf %205, %209 : vector<8x32xf32>
    %211 = arith.index_cast %180 : i32 to index
    %c0_50 = arith.constant 0 : index
    %212 = vector.load %arg12[%211, %c0_50] : memref<64x32xf32, #tpu.memory_space<vmem>>, vector<8x32xf32>
    tpu.vector_store %arg12[%211, %c0_50], %210 {strides = array<i32>} : memref<64x32xf32, #tpu.memory_space<vmem>>, vector<8x32xf32>,
    %c6_i32 = arith.constant 6 : i32
    %c8_i32_51 = arith.constant 8 : i32
    %213 = arith.muli %c6_i32, %c8_i32_51 : i32
    %214 = tpu.assume_multiple %213, 8 : i32
    %215 = arith.index_cast %214 : i32 to index
    %c0_52 = arith.constant 0 : index
    %216 = vector.load %arg11[%215, %c0_52] : memref<64x128xf32, #tpu.memory_space<vmem>>, vector<8x128xf32>
    %217 = arith.truncf %210 : vector<8x32xf32> to vector<8x32xbf16>
    %cst_53 = arith.constant dense<0.000000e+00> : vector<8x128xf32>
    %218 = tpu.matmul %217, %8, %cst_53 {dimension_numbers = #tpu.dot_dimension_numbers<[1], [0], [0], [1], [0, 0, 1, 1], [], []>} : vector<8x32xbf16>, vector<32x128xbf16>, vector<8x128xf32> -> vector<8x128xf32>
    %219 = arith.addf %216, %218 : vector<8x128xf32>
    %220 = vector.extract_strided_slice %219 {offsets = [0, 0], sizes = [8, 32], strides = [1, 1]} : vector<8x128xf32> to vector<8x32xf32>
    %221 = arith.negf %220 : vector<8x32xf32>
    %222 = math.exp %221 : vector<8x32xf32>
    %cst_54 = arith.constant 1.000000e+00 : f32
    %223 = vector.broadcast %cst_54 : f32 to vector<8x32xf32>
    %224 = arith.addf %223, %222 : vector<8x32xf32>
    %225 = arith.divf %223, %224 : vector<8x32xf32>
    %226 = vector.extract_strided_slice %219 {offsets = [0, 32], sizes = [8, 32], strides = [1, 1]} : vector<8x128xf32> to vector<8x32xf32>
    %227 = arith.negf %226 : vector<8x32xf32>
    %228 = math.exp %227 : vector<8x32xf32>
    %cst_55 = arith.constant 1.000000e+00 : f32
    %229 = vector.broadcast %cst_55 : f32 to vector<8x32xf32>
    %230 = arith.addf %229, %228 : vector<8x32xf32>
    %231 = arith.divf %229, %230 : vector<8x32xf32>
    %232 = vector.extract_strided_slice %219 {offsets = [0, 64], sizes = [8, 32], strides = [1, 1]} : vector<8x128xf32> to vector<8x32xf32>
    %233 = math.tanh %232 : vector<8x32xf32>
    %234 = vector.extract_strided_slice %219 {offsets = [0, 96], sizes = [8, 32], strides = [1, 1]} : vector<8x128xf32> to vector<8x32xf32>
    %235 = arith.negf %234 : vector<8x32xf32>
    %236 = math.exp %235 : vector<8x32xf32>
    %cst_56 = arith.constant 1.000000e+00 : f32
    %237 = vector.broadcast %cst_56 : f32 to vector<8x32xf32>
    %238 = arith.addf %237, %236 : vector<8x32xf32>
    %239 = arith.divf %237, %238 : vector<8x32xf32>
    %240 = arith.mulf %231, %208 : vector<8x32xf32>
    %241 = arith.mulf %225, %233 : vector<8x32xf32>
    %242 = arith.addf %240, %241 : vector<8x32xf32>
    %243 = math.tanh %242 : vector<8x32xf32>
    %244 = arith.mulf %239, %243 : vector<8x32xf32>
    %245 = arith.index_cast %214 : i32 to index
    %c0_57 = arith.constant 0 : index
    %246 = vector.load %arg12[%245, %c0_57] : memref<64x32xf32, #tpu.memory_space<vmem>>, vector<8x32xf32>
    tpu.vector_store %arg12[%245, %c0_57], %244 {strides = array<i32>} : memref<64x32xf32, #tpu.memory_space<vmem>>, vector<8x32xf32>,
    %c7_i32 = arith.constant 7 : i32
    %c8_i32_58 = arith.constant 8 : i32
    %247 = arith.muli %c7_i32, %c8_i32_58 : i32
    %248 = tpu.assume_multiple %247, 8 : i32
    %249 = arith.index_cast %248 : i32 to index
    %c0_59 = arith.constant 0 : index
    %250 = vector.load %arg11[%249, %c0_59] : memref<64x128xf32, #tpu.memory_space<vmem>>, vector<8x128xf32>
    %251 = arith.truncf %244 : vector<8x32xf32> to vector<8x32xbf16>
    %cst_60 = arith.constant dense<0.000000e+00> : vector<8x128xf32>
    %252 = tpu.matmul %251, %8, %cst_60 {dimension_numbers = #tpu.dot_dimension_numbers<[1], [0], [0], [1], [0, 0, 1, 1], [], []>} : vector<8x32xbf16>, vector<32x128xbf16>, vector<8x128xf32> -> vector<8x128xf32>
    %253 = arith.addf %250, %252 : vector<8x128xf32>
    %254 = vector.extract_strided_slice %253 {offsets = [0, 0], sizes = [8, 32], strides = [1, 1]} : vector<8x128xf32> to vector<8x32xf32>
    %255 = arith.negf %254 : vector<8x32xf32>
    %256 = math.exp %255 : vector<8x32xf32>
    %cst_61 = arith.constant 1.000000e+00 : f32
    %257 = vector.broadcast %cst_61 : f32 to vector<8x32xf32>
    %258 = arith.addf %257, %256 : vector<8x32xf32>
    %259 = arith.divf %257, %258 : vector<8x32xf32>
    %260 = vector.extract_strided_slice %253 {offsets = [0, 32], sizes = [8, 32], strides = [1, 1]} : vector<8x128xf32> to vector<8x32xf32>
    %261 = arith.negf %260 : vector<8x32xf32>
    %262 = math.exp %261 : vector<8x32xf32>
    %cst_62 = arith.constant 1.000000e+00 : f32
    %263 = vector.broadcast %cst_62 : f32 to vector<8x32xf32>
    %264 = arith.addf %263, %262 : vector<8x32xf32>
    %265 = arith.divf %263, %264 : vector<8x32xf32>
    %266 = vector.extract_strided_slice %253 {offsets = [0, 64], sizes = [8, 32], strides = [1, 1]} : vector<8x128xf32> to vector<8x32xf32>
    %267 = math.tanh %266 : vector<8x32xf32>
    %268 = vector.extract_strided_slice %253 {offsets = [0, 96], sizes = [8, 32], strides = [1, 1]} : vector<8x128xf32> to vector<8x32xf32>
    %269 = arith.negf %268 : vector<8x32xf32>
    %270 = math.exp %269 : vector<8x32xf32>
    %cst_63 = arith.constant 1.000000e+00 : f32
    %271 = vector.broadcast %cst_63 : f32 to vector<8x32xf32>
    %272 = arith.addf %271, %270 : vector<8x32xf32>
    %273 = arith.divf %271, %272 : vector<8x32xf32>
    %274 = arith.mulf %265, %242 : vector<8x32xf32>
    %275 = arith.mulf %259, %267 : vector<8x32xf32>
    %276 = arith.addf %274, %275 : vector<8x32xf32>
    %277 = math.tanh %276 : vector<8x32xf32>
    %278 = arith.mulf %273, %277 : vector<8x32xf32>
    %279 = arith.index_cast %248 : i32 to index
    %c0_64 = arith.constant 0 : index
    %280 = vector.load %arg12[%279, %c0_64] : memref<64x32xf32, #tpu.memory_space<vmem>>, vector<8x32xf32>
    tpu.vector_store %arg12[%279, %c0_64], %278 {strides = array<i32>} : memref<64x32xf32, #tpu.memory_space<vmem>>, vector<8x32xf32>,
    %c8_i32_65 = arith.constant 8 : i32
    %c0_66 = arith.constant 0 : index
    %c0_67 = arith.constant 0 : index
    %281 = vector.load %arg12[%c0_66, %c0_67] : memref<64x32xf32, #tpu.memory_space<vmem>>, vector<64x32xf32>
    %282 = arith.truncf %281 : vector<64x32xf32> to vector<64x32xbf16>
    %c0_68 = arith.constant 0 : index
    %c0_69 = arith.constant 0 : index
    %283 = vector.load %arg5[%c0_68, %c0_69] : memref<32x128xbf16, #tpu.memory_space<vmem>>, vector<32x128xbf16>
    %cst_70 = arith.constant dense<0.000000e+00> : vector<64x128xf32>
    %284 = tpu.matmul %282, %283, %cst_70 {dimension_numbers = #tpu.dot_dimension_numbers<[1], [0], [0], [1], [0, 0, 1, 1], [], []>} : vector<64x32xbf16>, vector<32x128xbf16>, vector<64x128xf32> -> vector<64x128xf32>
    %c0_71 = arith.constant 0 : index
    %c0_72 = arith.constant 0 : index
    %285 = vector.load %arg7[%c0_71, %c0_72] : memref<1x128xf32, #tpu.memory_space<vmem>>, vector<1x128xf32>
    %286 = vector.broadcast %285 : vector<1x128xf32> to vector<64x128xf32>
    %287 = arith.addf %284, %286 : vector<64x128xf32>
    %c0_73 = arith.constant 0 : index
    %c0_74 = arith.constant 0 : index
    %288 = vector.load %arg11[%c0_73, %c0_74] : memref<64x128xf32, #tpu.memory_space<vmem>>, vector<64x128xf32>
    tpu.vector_store %arg11[%c0_73, %c0_74], %287 {strides = array<i32>} : memref<64x128xf32, #tpu.memory_space<vmem>>, vector<64x128xf32>,
    %c0_75 = arith.constant 0 : index
    %c0_76 = arith.constant 0 : index
    %289 = vector.load %arg6[%c0_75, %c0_76] : memref<32x128xbf16, #tpu.memory_space<vmem>>, vector<32x128xbf16>
    %c0_i32_77 = arith.constant 0 : i32
    %c8_i32_78 = arith.constant 8 : i32
    %290 = arith.muli %c0_i32_77, %c8_i32_78 : i32
    %291 = tpu.assume_multiple %290, 8 : i32
    %292 = arith.index_cast %291 : i32 to index
    %c0_79 = arith.constant 0 : index
    %293 = vector.load %arg11[%292, %c0_79] : memref<64x128xf32, #tpu.memory_space<vmem>>, vector<8x128xf32>
    %294 = arith.truncf %0 : vector<8x32xf32> to vector<8x32xbf16>
    %cst_80 = arith.constant dense<0.000000e+00> : vector<8x128xf32>
    %295 = tpu.matmul %294, %289, %cst_80 {dimension_numbers = #tpu.dot_dimension_numbers<[1], [0], [0], [1], [0, 0, 1, 1], [], []>} : vector<8x32xbf16>, vector<32x128xbf16>, vector<8x128xf32> -> vector<8x128xf32>
    %296 = arith.addf %293, %295 : vector<8x128xf32>
    %297 = vector.extract_strided_slice %296 {offsets = [0, 0], sizes = [8, 32], strides = [1, 1]} : vector<8x128xf32> to vector<8x32xf32>
    %298 = arith.negf %297 : vector<8x32xf32>
    %299 = math.exp %298 : vector<8x32xf32>
    %cst_81 = arith.constant 1.000000e+00 : f32
    %300 = vector.broadcast %cst_81 : f32 to vector<8x32xf32>
    %301 = arith.addf %300, %299 : vector<8x32xf32>
    %302 = arith.divf %300, %301 : vector<8x32xf32>
    %303 = vector.extract_strided_slice %296 {offsets = [0, 32], sizes = [8, 32], strides = [1, 1]} : vector<8x128xf32> to vector<8x32xf32>
    %304 = arith.negf %303 : vector<8x32xf32>
    %305 = math.exp %304 : vector<8x32xf32>
    %cst_82 = arith.constant 1.000000e+00 : f32
    %306 = vector.broadcast %cst_82 : f32 to vector<8x32xf32>
    %307 = arith.addf %306, %305 : vector<8x32xf32>
    %308 = arith.divf %306, %307 : vector<8x32xf32>
    %309 = vector.extract_strided_slice %296 {offsets = [0, 64], sizes = [8, 32], strides = [1, 1]} : vector<8x128xf32> to vector<8x32xf32>
    %310 = math.tanh %309 : vector<8x32xf32>
    %311 = vector.extract_strided_slice %296 {offsets = [0, 96], sizes = [8, 32], strides = [1, 1]} : vector<8x128xf32> to vector<8x32xf32>
    %312 = arith.negf %311 : vector<8x32xf32>
    %313 = math.exp %312 : vector<8x32xf32>
    %cst_83 = arith.constant 1.000000e+00 : f32
    %314 = vector.broadcast %cst_83 : f32 to vector<8x32xf32>
    %315 = arith.addf %314, %313 : vector<8x32xf32>
    %316 = arith.divf %314, %315 : vector<8x32xf32>
    %317 = arith.mulf %308, %0 : vector<8x32xf32>
    %318 = arith.mulf %302, %310 : vector<8x32xf32>
    %319 = arith.addf %317, %318 : vector<8x32xf32>
    %320 = math.tanh %319 : vector<8x32xf32>
    %321 = arith.mulf %316, %320 : vector<8x32xf32>
    %322 = arith.index_cast %c0_i32_77 : i32 to index
    %c0_84 = arith.constant 0 : index
    %c0_85 = arith.constant 0 : index
    %323 = vector.load %arg8[%322, %c0_84, %c0_85] : memref<8x8x32xf32, #tpu.memory_space<vmem>>, vector<1x8x32xf32>
    %324 = vector.shape_cast %323 : vector<1x8x32xf32> to vector<8x32xf32>
    %325 = vector.shape_cast %321 : vector<8x32xf32> to vector<1x8x32xf32>
    tpu.vector_store %arg8[%322, %c0_84, %c0_85], %325 {strides = array<i32>} : memref<8x8x32xf32, #tpu.memory_space<vmem>>, vector<1x8x32xf32>,
    %c1_i32_86 = arith.constant 1 : i32
    %c8_i32_87 = arith.constant 8 : i32
    %326 = arith.muli %c1_i32_86, %c8_i32_87 : i32
    %327 = tpu.assume_multiple %326, 8 : i32
    %328 = arith.index_cast %327 : i32 to index
    %c0_88 = arith.constant 0 : index
    %329 = vector.load %arg11[%328, %c0_88] : memref<64x128xf32, #tpu.memory_space<vmem>>, vector<8x128xf32>
    %330 = arith.truncf %321 : vector<8x32xf32> to vector<8x32xbf16>
    %cst_89 = arith.constant dense<0.000000e+00> : vector<8x128xf32>
    %331 = tpu.matmul %330, %289, %cst_89 {dimension_numbers = #tpu.dot_dimension_numbers<[1], [0], [0], [1], [0, 0, 1, 1], [], []>} : vector<8x32xbf16>, vector<32x128xbf16>, vector<8x128xf32> -> vector<8x128xf32>
    %332 = arith.addf %329, %331 : vector<8x128xf32>
    %333 = vector.extract_strided_slice %332 {offsets = [0, 0], sizes = [8, 32], strides = [1, 1]} : vector<8x128xf32> to vector<8x32xf32>
    %334 = arith.negf %333 : vector<8x32xf32>
    %335 = math.exp %334 : vector<8x32xf32>
    %cst_90 = arith.constant 1.000000e+00 : f32
    %336 = vector.broadcast %cst_90 : f32 to vector<8x32xf32>
    %337 = arith.addf %336, %335 : vector<8x32xf32>
    %338 = arith.divf %336, %337 : vector<8x32xf32>
    %339 = vector.extract_strided_slice %332 {offsets = [0, 32], sizes = [8, 32], strides = [1, 1]} : vector<8x128xf32> to vector<8x32xf32>
    %340 = arith.negf %339 : vector<8x32xf32>
    %341 = math.exp %340 : vector<8x32xf32>
    %cst_91 = arith.constant 1.000000e+00 : f32
    %342 = vector.broadcast %cst_91 : f32 to vector<8x32xf32>
    %343 = arith.addf %342, %341 : vector<8x32xf32>
    %344 = arith.divf %342, %343 : vector<8x32xf32>
    %345 = vector.extract_strided_slice %332 {offsets = [0, 64], sizes = [8, 32], strides = [1, 1]} : vector<8x128xf32> to vector<8x32xf32>
    %346 = math.tanh %345 : vector<8x32xf32>
    %347 = vector.extract_strided_slice %332 {offsets = [0, 96], sizes = [8, 32], strides = [1, 1]} : vector<8x128xf32> to vector<8x32xf32>
    %348 = arith.negf %347 : vector<8x32xf32>
    %349 = math.exp %348 : vector<8x32xf32>
    %cst_92 = arith.constant 1.000000e+00 : f32
    %350 = vector.broadcast %cst_92 : f32 to vector<8x32xf32>
    %351 = arith.addf %350, %349 : vector<8x32xf32>
    %352 = arith.divf %350, %351 : vector<8x32xf32>
    %353 = arith.mulf %344, %319 : vector<8x32xf32>
    %354 = arith.mulf %338, %346 : vector<8x32xf32>
    %355 = arith.addf %353, %354 : vector<8x32xf32>
    %356 = math.tanh %355 : vector<8x32xf32>
    %357 = arith.mulf %352, %356 : vector<8x32xf32>
    %358 = arith.index_cast %c1_i32_86 : i32 to index
    %c0_93 = arith.constant 0 : index
    %c0_94 = arith.constant 0 : index
    %359 = vector.load %arg8[%358, %c0_93, %c0_94] : memref<8x8x32xf32, #tpu.memory_space<vmem>>, vector<1x8x32xf32>
    %360 = vector.shape_cast %359 : vector<1x8x32xf32> to vector<8x32xf32>
    %361 = vector.shape_cast %357 : vector<8x32xf32> to vector<1x8x32xf32>
    tpu.vector_store %arg8[%358, %c0_93, %c0_94], %361 {strides = array<i32>} : memref<8x8x32xf32, #tpu.memory_space<vmem>>, vector<1x8x32xf32>,
    %c2_i32_95 = arith.constant 2 : i32
    %c8_i32_96 = arith.constant 8 : i32
    %362 = arith.muli %c2_i32_95, %c8_i32_96 : i32
    %363 = tpu.assume_multiple %362, 8 : i32
    %364 = arith.index_cast %363 : i32 to index
    %c0_97 = arith.constant 0 : index
    %365 = vector.load %arg11[%364, %c0_97] : memref<64x128xf32, #tpu.memory_space<vmem>>, vector<8x128xf32>
    %366 = arith.truncf %357 : vector<8x32xf32> to vector<8x32xbf16>
    %cst_98 = arith.constant dense<0.000000e+00> : vector<8x128xf32>
    %367 = tpu.matmul %366, %289, %cst_98 {dimension_numbers = #tpu.dot_dimension_numbers<[1], [0], [0], [1], [0, 0, 1, 1], [], []>} : vector<8x32xbf16>, vector<32x128xbf16>, vector<8x128xf32> -> vector<8x128xf32>
    %368 = arith.addf %365, %367 : vector<8x128xf32>
    %369 = vector.extract_strided_slice %368 {offsets = [0, 0], sizes = [8, 32], strides = [1, 1]} : vector<8x128xf32> to vector<8x32xf32>
    %370 = arith.negf %369 : vector<8x32xf32>
    %371 = math.exp %370 : vector<8x32xf32>
    %cst_99 = arith.constant 1.000000e+00 : f32
    %372 = vector.broadcast %cst_99 : f32 to vector<8x32xf32>
    %373 = arith.addf %372, %371 : vector<8x32xf32>
    %374 = arith.divf %372, %373 : vector<8x32xf32>
    %375 = vector.extract_strided_slice %368 {offsets = [0, 32], sizes = [8, 32], strides = [1, 1]} : vector<8x128xf32> to vector<8x32xf32>
    %376 = arith.negf %375 : vector<8x32xf32>
    %377 = math.exp %376 : vector<8x32xf32>
    %cst_100 = arith.constant 1.000000e+00 : f32
    %378 = vector.broadcast %cst_100 : f32 to vector<8x32xf32>
    %379 = arith.addf %378, %377 : vector<8x32xf32>
    %380 = arith.divf %378, %379 : vector<8x32xf32>
    %381 = vector.extract_strided_slice %368 {offsets = [0, 64], sizes = [8, 32], strides = [1, 1]} : vector<8x128xf32> to vector<8x32xf32>
    %382 = math.tanh %381 : vector<8x32xf32>
    %383 = vector.extract_strided_slice %368 {offsets = [0, 96], sizes = [8, 32], strides = [1, 1]} : vector<8x128xf32> to vector<8x32xf32>
    %384 = arith.negf %383 : vector<8x32xf32>
    %385 = math.exp %384 : vector<8x32xf32>
    %cst_101 = arith.constant 1.000000e+00 : f32
    %386 = vector.broadcast %cst_101 : f32 to vector<8x32xf32>
    %387 = arith.addf %386, %385 : vector<8x32xf32>
    %388 = arith.divf %386, %387 : vector<8x32xf32>
    %389 = arith.mulf %380, %355 : vector<8x32xf32>
    %390 = arith.mulf %374, %382 : vector<8x32xf32>
    %391 = arith.addf %389, %390 : vector<8x32xf32>
    %392 = math.tanh %391 : vector<8x32xf32>
    %393 = arith.mulf %388, %392 : vector<8x32xf32>
    %394 = arith.index_cast %c2_i32_95 : i32 to index
    %c0_102 = arith.constant 0 : index
    %c0_103 = arith.constant 0 : index
    %395 = vector.load %arg8[%394, %c0_102, %c0_103] : memref<8x8x32xf32, #tpu.memory_space<vmem>>, vector<1x8x32xf32>
    %396 = vector.shape_cast %395 : vector<1x8x32xf32> to vector<8x32xf32>
    %397 = vector.shape_cast %393 : vector<8x32xf32> to vector<1x8x32xf32>
    tpu.vector_store %arg8[%394, %c0_102, %c0_103], %397 {strides = array<i32>} : memref<8x8x32xf32, #tpu.memory_space<vmem>>, vector<1x8x32xf32>,
    %c3_i32_104 = arith.constant 3 : i32
    %c8_i32_105 = arith.constant 8 : i32
    %398 = arith.muli %c3_i32_104, %c8_i32_105 : i32
    %399 = tpu.assume_multiple %398, 8 : i32
    %400 = arith.index_cast %399 : i32 to index
    %c0_106 = arith.constant 0 : index
    %401 = vector.load %arg11[%400, %c0_106] : memref<64x128xf32, #tpu.memory_space<vmem>>, vector<8x128xf32>
    %402 = arith.truncf %393 : vector<8x32xf32> to vector<8x32xbf16>
    %cst_107 = arith.constant dense<0.000000e+00> : vector<8x128xf32>
    %403 = tpu.matmul %402, %289, %cst_107 {dimension_numbers = #tpu.dot_dimension_numbers<[1], [0], [0], [1], [0, 0, 1, 1], [], []>} : vector<8x32xbf16>, vector<32x128xbf16>, vector<8x128xf32> -> vector<8x128xf32>
    %404 = arith.addf %401, %403 : vector<8x128xf32>
    %405 = vector.extract_strided_slice %404 {offsets = [0, 0], sizes = [8, 32], strides = [1, 1]} : vector<8x128xf32> to vector<8x32xf32>
    %406 = arith.negf %405 : vector<8x32xf32>
    %407 = math.exp %406 : vector<8x32xf32>
    %cst_108 = arith.constant 1.000000e+00 : f32
    %408 = vector.broadcast %cst_108 : f32 to vector<8x32xf32>
    %409 = arith.addf %408, %407 : vector<8x32xf32>
    %410 = arith.divf %408, %409 : vector<8x32xf32>
    %411 = vector.extract_strided_slice %404 {offsets = [0, 32], sizes = [8, 32], strides = [1, 1]} : vector<8x128xf32> to vector<8x32xf32>
    %412 = arith.negf %411 : vector<8x32xf32>
    %413 = math.exp %412 : vector<8x32xf32>
    %cst_109 = arith.constant 1.000000e+00 : f32
    %414 = vector.broadcast %cst_109 : f32 to vector<8x32xf32>
    %415 = arith.addf %414, %413 : vector<8x32xf32>
    %416 = arith.divf %414, %415 : vector<8x32xf32>
    %417 = vector.extract_strided_slice %404 {offsets = [0, 64], sizes = [8, 32], strides = [1, 1]} : vector<8x128xf32> to vector<8x32xf32>
    %418 = math.tanh %417 : vector<8x32xf32>
    %419 = vector.extract_strided_slice %404 {offsets = [0, 96], sizes = [8, 32], strides = [1, 1]} : vector<8x128xf32> to vector<8x32xf32>
    %420 = arith.negf %419 : vector<8x32xf32>
    %421 = math.exp %420 : vector<8x32xf32>
    %cst_110 = arith.constant 1.000000e+00 : f32
    %422 = vector.broadcast %cst_110 : f32 to vector<8x32xf32>
    %423 = arith.addf %422, %421 : vector<8x32xf32>
    %424 = arith.divf %422, %423 : vector<8x32xf32>
    %425 = arith.mulf %416, %391 : vector<8x32xf32>
    %426 = arith.mulf %410, %418 : vector<8x32xf32>
    %427 = arith.addf %425, %426 : vector<8x32xf32>
    %428 = math.tanh %427 : vector<8x32xf32>
    %429 = arith.mulf %424, %428 : vector<8x32xf32>
    %430 = arith.index_cast %c3_i32_104 : i32 to index
    %c0_111 = arith.constant 0 : index
    %c0_112 = arith.constant 0 : index
    %431 = vector.load %arg8[%430, %c0_111, %c0_112] : memref<8x8x32xf32, #tpu.memory_space<vmem>>, vector<1x8x32xf32>
    %432 = vector.shape_cast %431 : vector<1x8x32xf32> to vector<8x32xf32>
    %433 = vector.shape_cast %429 : vector<8x32xf32> to vector<1x8x32xf32>
    tpu.vector_store %arg8[%430, %c0_111, %c0_112], %433 {strides = array<i32>} : memref<8x8x32xf32, #tpu.memory_space<vmem>>, vector<1x8x32xf32>,
    %c4_i32_113 = arith.constant 4 : i32
    %c8_i32_114 = arith.constant 8 : i32
    %434 = arith.muli %c4_i32_113, %c8_i32_114 : i32
    %435 = tpu.assume_multiple %434, 8 : i32
    %436 = arith.index_cast %435 : i32 to index
    %c0_115 = arith.constant 0 : index
    %437 = vector.load %arg11[%436, %c0_115] : memref<64x128xf32, #tpu.memory_space<vmem>>, vector<8x128xf32>
    %438 = arith.truncf %429 : vector<8x32xf32> to vector<8x32xbf16>
    %cst_116 = arith.constant dense<0.000000e+00> : vector<8x128xf32>
    %439 = tpu.matmul %438, %289, %cst_116 {dimension_numbers = #tpu.dot_dimension_numbers<[1], [0], [0], [1], [0, 0, 1, 1], [], []>} : vector<8x32xbf16>, vector<32x128xbf16>, vector<8x128xf32> -> vector<8x128xf32>
    %440 = arith.addf %437, %439 : vector<8x128xf32>
    %441 = vector.extract_strided_slice %440 {offsets = [0, 0], sizes = [8, 32], strides = [1, 1]} : vector<8x128xf32> to vector<8x32xf32>
    %442 = arith.negf %441 : vector<8x32xf32>
    %443 = math.exp %442 : vector<8x32xf32>
    %cst_117 = arith.constant 1.000000e+00 : f32
    %444 = vector.broadcast %cst_117 : f32 to vector<8x32xf32>
    %445 = arith.addf %444, %443 : vector<8x32xf32>
    %446 = arith.divf %444, %445 : vector<8x32xf32>
    %447 = vector.extract_strided_slice %440 {offsets = [0, 32], sizes = [8, 32], strides = [1, 1]} : vector<8x128xf32> to vector<8x32xf32>
    %448 = arith.negf %447 : vector<8x32xf32>
    %449 = math.exp %448 : vector<8x32xf32>
    %cst_118 = arith.constant 1.000000e+00 : f32
    %450 = vector.broadcast %cst_118 : f32 to vector<8x32xf32>
    %451 = arith.addf %450, %449 : vector<8x32xf32>
    %452 = arith.divf %450, %451 : vector<8x32xf32>
    %453 = vector.extract_strided_slice %440 {offsets = [0, 64], sizes = [8, 32], strides = [1, 1]} : vector<8x128xf32> to vector<8x32xf32>
    %454 = math.tanh %453 : vector<8x32xf32>
    %455 = vector.extract_strided_slice %440 {offsets = [0, 96], sizes = [8, 32], strides = [1, 1]} : vector<8x128xf32> to vector<8x32xf32>
    %456 = arith.negf %455 : vector<8x32xf32>
    %457 = math.exp %456 : vector<8x32xf32>
    %cst_119 = arith.constant 1.000000e+00 : f32
    %458 = vector.broadcast %cst_119 : f32 to vector<8x32xf32>
    %459 = arith.addf %458, %457 : vector<8x32xf32>
    %460 = arith.divf %458, %459 : vector<8x32xf32>
    %461 = arith.mulf %452, %427 : vector<8x32xf32>
    %462 = arith.mulf %446, %454 : vector<8x32xf32>
    %463 = arith.addf %461, %462 : vector<8x32xf32>
    %464 = math.tanh %463 : vector<8x32xf32>
    %465 = arith.mulf %460, %464 : vector<8x32xf32>
    %466 = arith.index_cast %c4_i32_113 : i32 to index
    %c0_120 = arith.constant 0 : index
    %c0_121 = arith.constant 0 : index
    %467 = vector.load %arg8[%466, %c0_120, %c0_121] : memref<8x8x32xf32, #tpu.memory_space<vmem>>, vector<1x8x32xf32>
    %468 = vector.shape_cast %467 : vector<1x8x32xf32> to vector<8x32xf32>
    %469 = vector.shape_cast %465 : vector<8x32xf32> to vector<1x8x32xf32>
    tpu.vector_store %arg8[%466, %c0_120, %c0_121], %469 {strides = array<i32>} : memref<8x8x32xf32, #tpu.memory_space<vmem>>, vector<1x8x32xf32>,
    %c5_i32_122 = arith.constant 5 : i32
    %c8_i32_123 = arith.constant 8 : i32
    %470 = arith.muli %c5_i32_122, %c8_i32_123 : i32
    %471 = tpu.assume_multiple %470, 8 : i32
    %472 = arith.index_cast %471 : i32 to index
    %c0_124 = arith.constant 0 : index
    %473 = vector.load %arg11[%472, %c0_124] : memref<64x128xf32, #tpu.memory_space<vmem>>, vector<8x128xf32>
    %474 = arith.truncf %465 : vector<8x32xf32> to vector<8x32xbf16>
    %cst_125 = arith.constant dense<0.000000e+00> : vector<8x128xf32>
    %475 = tpu.matmul %474, %289, %cst_125 {dimension_numbers = #tpu.dot_dimension_numbers<[1], [0], [0], [1], [0, 0, 1, 1], [], []>} : vector<8x32xbf16>, vector<32x128xbf16>, vector<8x128xf32> -> vector<8x128xf32>
    %476 = arith.addf %473, %475 : vector<8x128xf32>
    %477 = vector.extract_strided_slice %476 {offsets = [0, 0], sizes = [8, 32], strides = [1, 1]} : vector<8x128xf32> to vector<8x32xf32>
    %478 = arith.negf %477 : vector<8x32xf32>
    %479 = math.exp %478 : vector<8x32xf32>
    %cst_126 = arith.constant 1.000000e+00 : f32
    %480 = vector.broadcast %cst_126 : f32 to vector<8x32xf32>
    %481 = arith.addf %480, %479 : vector<8x32xf32>
    %482 = arith.divf %480, %481 : vector<8x32xf32>
    %483 = vector.extract_strided_slice %476 {offsets = [0, 32], sizes = [8, 32], strides = [1, 1]} : vector<8x128xf32> to vector<8x32xf32>
    %484 = arith.negf %483 : vector<8x32xf32>
    %485 = math.exp %484 : vector<8x32xf32>
    %cst_127 = arith.constant 1.000000e+00 : f32
    %486 = vector.broadcast %cst_127 : f32 to vector<8x32xf32>
    %487 = arith.addf %486, %485 : vector<8x32xf32>
    %488 = arith.divf %486, %487 : vector<8x32xf32>
    %489 = vector.extract_strided_slice %476 {offsets = [0, 64], sizes = [8, 32], strides = [1, 1]} : vector<8x128xf32> to vector<8x32xf32>
    %490 = math.tanh %489 : vector<8x32xf32>
    %491 = vector.extract_strided_slice %476 {offsets = [0, 96], sizes = [8, 32], strides = [1, 1]} : vector<8x128xf32> to vector<8x32xf32>
    %492 = arith.negf %491 : vector<8x32xf32>
    %493 = math.exp %492 : vector<8x32xf32>
    %cst_128 = arith.constant 1.000000e+00 : f32
    %494 = vector.broadcast %cst_128 : f32 to vector<8x32xf32>
    %495 = arith.addf %494, %493 : vector<8x32xf32>
    %496 = arith.divf %494, %495 : vector<8x32xf32>
    %497 = arith.mulf %488, %463 : vector<8x32xf32>
    %498 = arith.mulf %482, %490 : vector<8x32xf32>
    %499 = arith.addf %497, %498 : vector<8x32xf32>
    %500 = math.tanh %499 : vector<8x32xf32>
    %501 = arith.mulf %496, %500 : vector<8x32xf32>
    %502 = arith.index_cast %c5_i32_122 : i32 to index
    %c0_129 = arith.constant 0 : index
    %c0_130 = arith.constant 0 : index
    %503 = vector.load %arg8[%502, %c0_129, %c0_130] : memref<8x8x32xf32, #tpu.memory_space<vmem>>, vector<1x8x32xf32>
    %504 = vector.shape_cast %503 : vector<1x8x32xf32> to vector<8x32xf32>
    %505 = vector.shape_cast %501 : vector<8x32xf32> to vector<1x8x32xf32>
    tpu.vector_store %arg8[%502, %c0_129, %c0_130], %505 {strides = array<i32>} : memref<8x8x32xf32, #tpu.memory_space<vmem>>, vector<1x8x32xf32>,
    %c6_i32_131 = arith.constant 6 : i32
    %c8_i32_132 = arith.constant 8 : i32
    %506 = arith.muli %c6_i32_131, %c8_i32_132 : i32
    %507 = tpu.assume_multiple %506, 8 : i32
    %508 = arith.index_cast %507 : i32 to index
    %c0_133 = arith.constant 0 : index
    %509 = vector.load %arg11[%508, %c0_133] : memref<64x128xf32, #tpu.memory_space<vmem>>, vector<8x128xf32>
    %510 = arith.truncf %501 : vector<8x32xf32> to vector<8x32xbf16>
    %cst_134 = arith.constant dense<0.000000e+00> : vector<8x128xf32>
    %511 = tpu.matmul %510, %289, %cst_134 {dimension_numbers = #tpu.dot_dimension_numbers<[1], [0], [0], [1], [0, 0, 1, 1], [], []>} : vector<8x32xbf16>, vector<32x128xbf16>, vector<8x128xf32> -> vector<8x128xf32>
    %512 = arith.addf %509, %511 : vector<8x128xf32>
    %513 = vector.extract_strided_slice %512 {offsets = [0, 0], sizes = [8, 32], strides = [1, 1]} : vector<8x128xf32> to vector<8x32xf32>
    %514 = arith.negf %513 : vector<8x32xf32>
    %515 = math.exp %514 : vector<8x32xf32>
    %cst_135 = arith.constant 1.000000e+00 : f32
    %516 = vector.broadcast %cst_135 : f32 to vector<8x32xf32>
    %517 = arith.addf %516, %515 : vector<8x32xf32>
    %518 = arith.divf %516, %517 : vector<8x32xf32>
    %519 = vector.extract_strided_slice %512 {offsets = [0, 32], sizes = [8, 32], strides = [1, 1]} : vector<8x128xf32> to vector<8x32xf32>
    %520 = arith.negf %519 : vector<8x32xf32>
    %521 = math.exp %520 : vector<8x32xf32>
    %cst_136 = arith.constant 1.000000e+00 : f32
    %522 = vector.broadcast %cst_136 : f32 to vector<8x32xf32>
    %523 = arith.addf %522, %521 : vector<8x32xf32>
    %524 = arith.divf %522, %523 : vector<8x32xf32>
    %525 = vector.extract_strided_slice %512 {offsets = [0, 64], sizes = [8, 32], strides = [1, 1]} : vector<8x128xf32> to vector<8x32xf32>
    %526 = math.tanh %525 : vector<8x32xf32>
    %527 = vector.extract_strided_slice %512 {offsets = [0, 96], sizes = [8, 32], strides = [1, 1]} : vector<8x128xf32> to vector<8x32xf32>
    %528 = arith.negf %527 : vector<8x32xf32>
    %529 = math.exp %528 : vector<8x32xf32>
    %cst_137 = arith.constant 1.000000e+00 : f32
    %530 = vector.broadcast %cst_137 : f32 to vector<8x32xf32>
    %531 = arith.addf %530, %529 : vector<8x32xf32>
    %532 = arith.divf %530, %531 : vector<8x32xf32>
    %533 = arith.mulf %524, %499 : vector<8x32xf32>
    %534 = arith.mulf %518, %526 : vector<8x32xf32>
    %535 = arith.addf %533, %534 : vector<8x32xf32>
    %536 = math.tanh %535 : vector<8x32xf32>
    %537 = arith.mulf %532, %536 : vector<8x32xf32>
    %538 = arith.index_cast %c6_i32_131 : i32 to index
    %c0_138 = arith.constant 0 : index
    %c0_139 = arith.constant 0 : index
    %539 = vector.load %arg8[%538, %c0_138, %c0_139] : memref<8x8x32xf32, #tpu.memory_space<vmem>>, vector<1x8x32xf32>
    %540 = vector.shape_cast %539 : vector<1x8x32xf32> to vector<8x32xf32>
    %541 = vector.shape_cast %537 : vector<8x32xf32> to vector<1x8x32xf32>
    tpu.vector_store %arg8[%538, %c0_138, %c0_139], %541 {strides = array<i32>} : memref<8x8x32xf32, #tpu.memory_space<vmem>>, vector<1x8x32xf32>,
    %c7_i32_140 = arith.constant 7 : i32
    %c8_i32_141 = arith.constant 8 : i32
    %542 = arith.muli %c7_i32_140, %c8_i32_141 : i32
    %543 = tpu.assume_multiple %542, 8 : i32
    %544 = arith.index_cast %543 : i32 to index
    %c0_142 = arith.constant 0 : index
    %545 = vector.load %arg11[%544, %c0_142] : memref<64x128xf32, #tpu.memory_space<vmem>>, vector<8x128xf32>
    %546 = arith.truncf %537 : vector<8x32xf32> to vector<8x32xbf16>
    %cst_143 = arith.constant dense<0.000000e+00> : vector<8x128xf32>
    %547 = tpu.matmul %546, %289, %cst_143 {dimension_numbers = #tpu.dot_dimension_numbers<[1], [0], [0], [1], [0, 0, 1, 1], [], []>} : vector<8x32xbf16>, vector<32x128xbf16>, vector<8x128xf32> -> vector<8x128xf32>
    %548 = arith.addf %545, %547 : vector<8x128xf32>
    %549 = vector.extract_strided_slice %548 {offsets = [0, 0], sizes = [8, 32], strides = [1, 1]} : vector<8x128xf32> to vector<8x32xf32>
    %550 = arith.negf %549 : vector<8x32xf32>
    %551 = math.exp %550 : vector<8x32xf32>
    %cst_144 = arith.constant 1.000000e+00 : f32
    %552 = vector.broadcast %cst_144 : f32 to vector<8x32xf32>
    %553 = arith.addf %552, %551 : vector<8x32xf32>
    %554 = arith.divf %552, %553 : vector<8x32xf32>
    %555 = vector.extract_strided_slice %548 {offsets = [0, 32], sizes = [8, 32], strides = [1, 1]} : vector<8x128xf32> to vector<8x32xf32>
    %556 = arith.negf %555 : vector<8x32xf32>
    %557 = math.exp %556 : vector<8x32xf32>
    %cst_145 = arith.constant 1.000000e+00 : f32
    %558 = vector.broadcast %cst_145 : f32 to vector<8x32xf32>
    %559 = arith.addf %558, %557 : vector<8x32xf32>
    %560 = arith.divf %558, %559 : vector<8x32xf32>
    %561 = vector.extract_strided_slice %548 {offsets = [0, 64], sizes = [8, 32], strides = [1, 1]} : vector<8x128xf32> to vector<8x32xf32>
    %562 = math.tanh %561 : vector<8x32xf32>
    %563 = vector.extract_strided_slice %548 {offsets = [0, 96], sizes = [8, 32], strides = [1, 1]} : vector<8x128xf32> to vector<8x32xf32>
    %564 = arith.negf %563 : vector<8x32xf32>
    %565 = math.exp %564 : vector<8x32xf32>
    %cst_146 = arith.constant 1.000000e+00 : f32
    %566 = vector.broadcast %cst_146 : f32 to vector<8x32xf32>
    %567 = arith.addf %566, %565 : vector<8x32xf32>
    %568 = arith.divf %566, %567 : vector<8x32xf32>
    %569 = arith.mulf %560, %535 : vector<8x32xf32>
    %570 = arith.mulf %554, %562 : vector<8x32xf32>
    %571 = arith.addf %569, %570 : vector<8x32xf32>
    %572 = math.tanh %571 : vector<8x32xf32>
    %573 = arith.mulf %568, %572 : vector<8x32xf32>
    %574 = arith.index_cast %c7_i32_140 : i32 to index
    %c0_147 = arith.constant 0 : index
    %c0_148 = arith.constant 0 : index
    %575 = vector.load %arg8[%574, %c0_147, %c0_148] : memref<8x8x32xf32, #tpu.memory_space<vmem>>, vector<1x8x32xf32>
    %576 = vector.shape_cast %575 : vector<1x8x32xf32> to vector<8x32xf32>
    %577 = vector.shape_cast %573 : vector<8x32xf32> to vector<1x8x32xf32>
    tpu.vector_store %arg8[%574, %c0_147, %c0_148], %577 {strides = array<i32>} : memref<8x8x32xf32, #tpu.memory_space<vmem>>, vector<1x8x32xf32>,
    %c8_i32_149 = arith.constant 8 : i32
    %c0_150 = arith.constant 0 : index
    %c0_151 = arith.constant 0 : index
    %c0_152 = arith.constant 0 : index
    %578 = vector.load %arg9[%c0_150, %c0_151, %c0_152] : memref<2x8x32xf32, #tpu.memory_space<vmem>>, vector<1x8x32xf32>
    %579 = vector.shape_cast %578 : vector<1x8x32xf32> to vector<8x32xf32>
    %580 = vector.shape_cast %278 : vector<8x32xf32> to vector<1x8x32xf32>
    tpu.vector_store %arg9[%c0_150, %c0_151, %c0_152], %580 {strides = array<i32>} : memref<2x8x32xf32, #tpu.memory_space<vmem>>, vector<1x8x32xf32>,
    %c1 = arith.constant 1 : index
    %c0_153 = arith.constant 0 : index
    %c0_154 = arith.constant 0 : index
    %581 = vector.load %arg9[%c1, %c0_153, %c0_154] : memref<2x8x32xf32, #tpu.memory_space<vmem>>, vector<1x8x32xf32>
    %582 = vector.shape_cast %581 : vector<1x8x32xf32> to vector<8x32xf32>
    %583 = vector.shape_cast %573 : vector<8x32xf32> to vector<1x8x32xf32>
    tpu.vector_store %arg9[%c1, %c0_153, %c0_154], %583 {strides = array<i32>} : memref<2x8x32xf32, #tpu.memory_space<vmem>>, vector<1x8x32xf32>,
    %c0_155 = arith.constant 0 : index
    %c0_156 = arith.constant 0 : index
    %c0_157 = arith.constant 0 : index
    %584 = vector.load %arg10[%c0_155, %c0_156, %c0_157] : memref<2x8x32xf32, #tpu.memory_space<vmem>>, vector<1x8x32xf32>
    %585 = vector.shape_cast %584 : vector<1x8x32xf32> to vector<8x32xf32>
    %586 = vector.shape_cast %276 : vector<8x32xf32> to vector<1x8x32xf32>
    tpu.vector_store %arg10[%c0_155, %c0_156, %c0_157], %586 {strides = array<i32>} : memref<2x8x32xf32, #tpu.memory_space<vmem>>, vector<1x8x32xf32>,
    %c1_158 = arith.constant 1 : index
    %c0_159 = arith.constant 0 : index
    %c0_160 = arith.constant 0 : index
    %587 = vector.load %arg10[%c1_158, %c0_159, %c0_160] : memref<2x8x32xf32, #tpu.memory_space<vmem>>, vector<1x8x32xf32>
    %588 = vector.shape_cast %587 : vector<1x8x32xf32> to vector<8x32xf32>
    %589 = vector.shape_cast %571 : vector<8x32xf32> to vector<1x8x32xf32>
    tpu.vector_store %arg10[%c1_158, %c0_159, %c0_160], %589 {strides = array<i32>} : memref<2x8x32xf32, #tpu.memory_space<vmem>>, vector<1x8x32xf32>,
    return
  }
  func.func @transform_0(%arg0: i32) -> (i32, i32) {
    %c0_i32 = arith.constant 0 : i32
    %c0_i32_0 = arith.constant 0 : i32
    %c0_i32_1 = arith.constant 0 : i32
    return %c0_i32, %c0_i32_0 : i32, i32
  }
  func.func @transform_1(%arg0: i32) -> (i32, i32) {
    %c0_i32 = arith.constant 0 : i32
    %c0_i32_0 = arith.constant 0 : i32
    %c0_i32_1 = arith.constant 0 : i32
    return %c0_i32, %c0_i32_0 : i32, i32
  }
  func.func @transform_2(%arg0: i32) -> (i32, i32) {
    %c0_i32 = arith.constant 0 : i32
    %c0_i32_0 = arith.constant 0 : i32
    %c0_i32_1 = arith.constant 0 : i32
    return %c0_i32, %c0_i32_0 : i32, i32
  }
  func.func @transform_3(%arg0: i32) -> (i32, i32) {
    %c0_i32 = arith.constant 0 : i32
    %c0_i32_0 = arith.constant 0 : i32
    %c0_i32_1 = arith.constant 0 : i32
    return %c0_i32, %c0_i32_0 : i32, i32
  }
  func.func @transform_4(%arg0: i32) -> (i32, i32) {
    %c0_i32 = arith.constant 0 : i32
    %c0_i32_0 = arith.constant 0 : i32
    %c0_i32_1 = arith.constant 0 : i32
    return %c0_i32, %c0_i32_0 : i32, i32
  }
  func.func @transform_5(%arg0: i32) -> (i32, i32) {
    %c0_i32 = arith.constant 0 : i32
    %c0_i32_0 = arith.constant 0 : i32
    %c0_i32_1 = arith.constant 0 : i32
    return %c0_i32, %c0_i32_0 : i32, i32
  }
  func.func @transform_6(%arg0: i32) -> (i32, i32) {
    %c0_i32 = arith.constant 0 : i32
    %c0_i32_0 = arith.constant 0 : i32
    %c0_i32_1 = arith.constant 0 : i32
    return %c0_i32, %c0_i32_0 : i32, i32
  }
  func.func @transform_7(%arg0: i32) -> (i32, i32, i32) {
    %c0_i32 = arith.constant 0 : i32
    %c0_i32_0 = arith.constant 0 : i32
    %c0_i32_1 = arith.constant 0 : i32
    %c0_i32_2 = arith.constant 0 : i32
    return %c0_i32, %c0_i32_0, %c0_i32_1 : i32, i32, i32
  }
  func.func @transform_8(%arg0: i32) -> (i32, i32, i32) {
    %c0_i32 = arith.constant 0 : i32
    %c0_i32_0 = arith.constant 0 : i32
    %c0_i32_1 = arith.constant 0 : i32
    %c0_i32_2 = arith.constant 0 : i32
    return %c0_i32, %c0_i32_0, %c0_i32_1 : i32, i32, i32
  }
  func.func @transform_9(%arg0: i32) -> (i32, i32, i32) {
    %c0_i32 = arith.constant 0 : i32
    %c0_i32_0 = arith.constant 0 : i32
    %c0_i32_1 = arith.constant 0 : i32
    %c0_i32_2 = arith.constant 0 : i32
    return %c0_i32, %c0_i32_0, %c0_i32_1 : i32, i32, i32
  }
}

</mosaic_0001>

<llo_original>
// kernel: tpu_custom_call.1
$region0: #{tpu_custom_call.1}
  #allocation0 [shape = 'u32[]', space=smem, size = 0x4, offset = 0x4, fixed_abs, tag = 'smem constant byte address 0x4 - core index']
  #allocation1 [shape = 'u32[72,128]{1,0:T(1,128)}', space=vmem, size = 0x9000, scoped, tag = 'internal scratch']
  #allocation2 [shape = 'f32[64,128]{1,0:T(8,128)}', space=vmem, size = 0x8000, scoped, tag = 'scratch operand']
  #allocation3 [shape = 'f32[64,32]{1,0:T(8,128)}', space=vmem, size = 0x8000, scoped, tag = 'scratch operand']
  %s0 = inlined_call_operand.vmem [shape: bf16[64,32], index: 0, kind: input, shape index: {}]
  %s1 = inlined_call_operand.vmem [shape: bf16[32,128], index: 1, kind: input, shape index: {}]
  %s2 = inlined_call_operand.vmem [shape: bf16[32,128], index: 2, kind: input, shape index: {}]
  %s3 = inlined_call_operand.vmem [shape: f32[1,128], index: 3, kind: input, shape index: {}]
  %s4 = inlined_call_operand.vmem [shape: bf16[32,128], index: 4, kind: input, shape index: {}]
  %s5 = inlined_call_operand.hbm [shape: bf16[32,128], index: 5, kind: input, shape index: {}]
  %s6 = inlined_call_operand.vmem [shape: f32[1,128], index: 6, kind: input, shape index: {}]
  %s7 = inlined_call_operand.hbm [shape: f32[8,8,32], index: 7, kind: output, shape index: {0}]
  %s8 = inlined_call_operand.hbm [shape: f32[2,8,32], index: 8, kind: output, shape index: {1}]
  %s9 = inlined_call_operand.hbm [shape: f32[2,8,32], index: 9, kind: output, shape index: {2}]
  %10 = xla_tuple %s7, %s8, %s9
  %s11 = sld [smem:[#allocation0]]
  $region58: #{tpu_custom_call.1} parent=0
    _
  %s13 = ssub.s32 1, %s11
  %s14 = scalar_select 0, %s13, %s11
  $region1: #{tpu_custom_call.1} parent=0
    #allocation4 [shape = 'u8[8192]{0}', space=vmem, size = 0x2000, scoped, tag = 'input window, operand 5, single buffered']
    #allocation5 [shape = 's32[1]{0}', space=sflag, size = 0x4, scoped, tag = 'scoped memory for tpu_custom_call.1']
    #allocation6 [shape = 's32[1]{0}', space=sflag, size = 0x4, scoped, tag = 'scoped memory for tpu_custom_call.1']
    #allocation7 [shape = 'u8[32768]{0}', space=vmem, size = 0x8000, scoped, tag = 'output window, operand 0, single buffered']
    #allocation8 [shape = 'u8[8192]{0}', space=vmem, size = 0x2000, scoped, tag = 'output window, operand 1, single buffered']
    #allocation9 [shape = 's32[1]{0}', space=sflag, size = 0x4, scoped, tag = 'scoped memory for tpu_custom_call.1']
    #allocation10 [shape = 'u8[8192]{0}', space=vmem, size = 0x2000, scoped, tag = 'output window, operand 2, single buffered']
    %15 = vsyncpa [#allocation5], 0
    %16 = vsyncpa [#allocation6], 0
    %17 = vsyncpa [#allocation9], 0
    // Predicated region
    $region2: #{tpu_custom_call.1} parent=1 // pred_check
      _
    $region3: #{tpu_custom_call.1} parent=1 // pred_check_branch
      %19 = sbr.rel (0) target = $region5
    $region4: #{tpu_custom_call.1} parent=1 // pred_region
      _
    $region5: #{tpu_custom_call.1} parent=1 // pred_fallthru
      _
    // Predicated region
    $region6: #{tpu_custom_call.1} parent=1 // pred_check
      _
    $region7: #{tpu_custom_call.1} parent=1 // pred_check_branch
      %21 = sbr.rel (0) target = $region9
    $region8: #{tpu_custom_call.1} parent=1 // pred_region
      _
    $region9: #{tpu_custom_call.1} parent=1 // pred_fallthru
      _
    // Predicated region
    $region10: #{tpu_custom_call.1} parent=1 // pred_check
      _
    $region11: #{tpu_custom_call.1} parent=1 // pred_check_branch
      %23 = sbr.rel (0) target = $region13
    $region12: #{tpu_custom_call.1} parent=1 // pred_region
      _
    $region13: #{tpu_custom_call.1} parent=1 // pred_fallthru
      _
    // Predicated region
    $region14: #{tpu_custom_call.1} parent=1 // pred_check
      _
    $region15: #{tpu_custom_call.1} parent=1 // pred_check_branch
      %25 = sbr.rel (0) target = $region17
    $region16: #{tpu_custom_call.1} parent=1 // pred_region
      _
    $region17: #{tpu_custom_call.1} parent=1 // pred_fallthru
      _
    // Predicated region
    $region18: #{tpu_custom_call.1} parent=1 // pred_check
      _
    $region19: #{tpu_custom_call.1} parent=1 // pred_check_branch
      %27 = sbr.rel (0) target = $region21
    $region20: #{tpu_custom_call.1} parent=1 // pred_region
      _
    $region21: #{tpu_custom_call.1} parent=1 // pred_fallthru
      _
    // Predicated region
    $region22: #{tpu_custom_call.1} parent=1 // pred_check
      _
    $region23: #{tpu_custom_call.1} parent=1 // pred_check_branch
      %29 = sbr.rel (0) target = $region25
    $region24: #{tpu_custom_call.1} parent=1 // pred_region
      %31 = vsyncadd [#allocation5], 0
      %s32 = sshll.u32 %s5, 4
      %s33 = int_to_ptr.hbm [resolvable:$true] %s32
      %s34 = sshll.u32 [#allocation4], 4
      %s35 = int_to_ptr.vmem [resolvable:$true] %s34
      %40 = dma.hbm_to_vmem [thread:$0]  %s33, 256, %s35, [#allocation5], 64, 64, 4
    $region25: #{tpu_custom_call.1} parent=1 // pred_fallthru
      _
    // Predicated region
    $region26: #{tpu_custom_call.1} parent=1 // pred_check
      _
    $region27: #{tpu_custom_call.1} parent=1 // pred_check_branch
      %42 = sbr.rel (0) target = $region29
    $region28: #{tpu_custom_call.1} parent=1 // pred_region
      _
    $region29: #{tpu_custom_call.1} parent=1 // pred_fallthru
      _
    // Predicated region
    $region30: #{tpu_custom_call.1} parent=1 // pred_check
      _
    $region31: #{tpu_custom_call.1} parent=1 // pred_check_branch
      %44 = sbr.rel (0) target = $region33
    $region32: #{tpu_custom_call.1} parent=1 // pred_region
      %46 = dma.done [#allocation5], 256
    $region33: #{tpu_custom_call.1} parent=1 // pred_fallthru
      _
    %v48 = vld [vmem:[%s0] sm:$0xf]
    %v49 = vld [vmem:[%s0 + $0x4] sm:$0xf]
    %v50 = vld [vmem:[%s0 + $0x8] sm:$0xf]
    %v51 = vld [vmem:[%s0 + $0xc] sm:$0xf]
    %v52 = vld [vmem:[%s0 + $0x10] sm:$0xf]
    %v53 = vld [vmem:[%s0 + $0x14] sm:$0xf]
    %v54 = vld [vmem:[%s0 + $0x18] sm:$0xf]
    %v55 = vld [vmem:[%s0 + $0x1c] sm:$0xf]
    %v56 = vld [vmem:[%s1] sm:$0xf]
    %v57 = vld [vmem:[%s1 + $0x4] sm:$0xf]
    %v58 = vld [vmem:[%s1 + $0x8] sm:$0xf]
    %v59 = vld [vmem:[%s1 + $0xc] sm:$0xf]
    %v60 = vld [vmem:[%s3] sm:$0x1]
    %v62 = vperm.slane %v60, 0
    %v72 = vunpack.c.l.b16 %v48
    %v73 = vunpack.c.l.b16 %v49
    %v74 = vunpack.c.l.b16 %v50
    %v75 = vunpack.c.l.b16 %v51
    %v76 = vunpack.c.l.b16 %v52
    %v77 = vunpack.c.l.b16 %v53
    %v78 = vunpack.c.l.b16 %v54
    %v79 = vunpack.c.l.b16 %v55
    %v80 = vpack.c.b16 %v73, %v72
    %v81 = vpack.c.b16 %v75, %v74
    %v82 = vpack.c.b16 %v77, %v76
    %v83 = vpack.c.b16 %v79, %v78
    %v88 = vunpack.c.l.b16 %v56
    %v89 = vunpack.c.l.b16 %v57
    %v90 = vunpack.c.l.b16 %v58
    %v91 = vunpack.c.l.b16 %v59
    %v92 = vpack.c.b16 %v89, %v88
    %v93 = vpack.c.b16 %v91, %v90
    %vm96 = vcmask 261120
    %v98 = vsel %vm96, %v80, 0
    %v101 = vsel %vm96, %v81, 0
    %v104 = vsel %vm96, %v82, 0
    %v107 = vsel %vm96, %v83, 0
    %109 = vmatpush.bf16.msra.mxu0 0
    %110 = vmatpush.bf16.msra.mxu0 0
    %111 = vmatpush.bf16.msra.mxu0 0
    %112 = vmatpush.bf16.msra.mxu0 0
    %113 = vmatpush.bf16.msra.mxu0 0
    %114 = vmatpush.bf16.msra.mxu0 0
    %115 = vmatpush.bf16.msra.mxu0 %v93
    %116 = vmatpush.bf16.msra.mxu0 %v92
    %117 = vmatmul.bf16.gmra.mxu0 %v98
    %v118 = vpop.f32.mrf.mxu0
    %v119 = vadd.f32 %v62, %v118
    %v120 = vpop.f32.mrf.mxu0
    %v121 = vadd.f32 %v62, %v120
    %122 = vmatmul.bf16.gmra.mxu0 %v101
    %v123 = vpop.f32.mrf.mxu0
    %v124 = vadd.f32 %v62, %v123
    %v125 = vpop.f32.mrf.mxu0
    %v126 = vadd.f32 %v62, %v125
    %127 = vmatmul.bf16.gmra.mxu0 %v104
    %v128 = vpop.f32.mrf.mxu0
    %v129 = vadd.f32 %v62, %v128
    %v130 = vpop.f32.mrf.mxu0
    %v131 = vadd.f32 %v62, %v130
    %132 = vmatmul.bf16.gmra.mxu0 %v107
    %v133 = vpop.f32.mrf.mxu0
    %v134 = vadd.f32 %v62, %v133
    %v135 = vpop.f32.mrf.mxu0
    %v136 = vadd.f32 %v62, %v135
    %137 = vdwg.mxu0
    %138 = vst [vmem:[#allocation2] sm:$0xff] %v119
    %139 = vst [vmem:[#allocation2 + $0x8] sm:$0xff] %v121
    %140 = vst [vmem:[#allocation2 + $0x10] sm:$0xff] %v124
    %141 = vst [vmem:[#allocation2 + $0x18] sm:$0xff] %v126
    %142 = vst [vmem:[#allocation2 + $0x20] sm:$0xff] %v129
    %143 = vst [vmem:[#allocation2 + $0x28] sm:$0xff] %v131
    %144 = vst [vmem:[#allocation2 + $0x30] sm:$0xff] %v134
    %145 = vst [vmem:[#allocation2 + $0x38] sm:$0xff] %v136
    %v146 = vld [vmem:[%s2] sm:$0xf]
    %v147 = vld [vmem:[%s2 + $0x4] sm:$0xf]
    %v148 = vld [vmem:[%s2 + $0x8] sm:$0xf]
    %v149 = vld [vmem:[%s2 + $0xc] sm:$0xf]
    %v150 = vld [vmem:[#allocation2] sm:$0xff]
    %v155 = vunpack.c.l.b16 %v146
    %v156 = vunpack.c.l.b16 %v147
    %v157 = vunpack.c.l.b16 %v148
    %v158 = vunpack.c.l.b16 %v149
    %v159 = vpack.c.b16 %v156, %v155
    %v160 = vpack.c.b16 %v158, %v157
    %v164 = vsel %vm96, 0, 0
    %166 = vmatpush.bf16.msra.mxu0 0
    %167 = vmatpush.bf16.msra.mxu0 0
    %168 = vmatpush.bf16.msra.mxu0 0
    %169 = vmatpush.bf16.msra.mxu0 0
    %170 = vmatpush.bf16.msra.mxu0 0
    %171 = vmatpush.bf16.msra.mxu0 0
    %172 = vmatpush.bf16.msra.mxu0 %v160
    %173 = vmatpush.bf16.msra.mxu0 %v159
    %174 = vmatmul.bf16.gmra.mxu0 %v164
    %v175 = vpop.f32.mrf.mxu0
    %v176 = vadd.f32 0.0, %v175
    %v177 = vpop.f32.mrf.mxu0
    %178 = vdwg.mxu0
    %v179 = vadd.f32 %v150, %v176
    %v180 = vxor.u32 %v179, 2147483648
    %v181 = vmul.f32 %v180, 1.442695
    %v182 = vpow.pop %v181
    %v183 = vadd.f32 %v182, 1.0
    %v184 = vrcp.pop %v183
    %v185 = vmul.f32 %v183, %v184
    %v186 = vsub.f32 1.0, %v185
    %v187 = vmul.f32 %v184, %v186
    %v188 = vadd.f32 %v184, %v187
    %vm189 = vweird.f32 %v183
    %vm190 = vweird.f32 %v184
    %vm191 = vmor %vm189, %vm190
    %v192 = vsel %vm191, %v184, %v188
    %v193 = vand.u32 2147483647, %v183
    %vm194 = vcmp.eq.f32.partialorder %v193, 8.507059e+37
    %v195 = vand.u32 %v183, 2147483648
    %v196 = vor.u32 1.1754944e-38, %v195
    %v197 = vsel %vm194, %v196, %v192
    %v198 = vmul.f32 1.0, %v197
    %v199 = vtanh.pop %v179
    %v200 = vmul.f32 %v198, 0.0
    %202 = vrot.lane.b32.xlu0 %v199, 64
    %v203 = vpop.permute.xlu0 %202
    %v205 = vmul.f32 %v198, %v203
    %207 = vrot.lane.b32.xlu0 %v205, 32
    %v208 = vpop.permute.xlu0 %207
    %v210 = vadd.f32 %v200, %v208
    %v211 = vtanh.pop %v210
    %213 = vrot.lane.b32.xlu0 %v211, 64
    %v214 = vpop.permute.xlu0 %213
    %v216 = vmul.f32 %v198, %v214
    %218 = vrot.lane.b32.xlu0 %v216, 32
    %v219 = vpop.permute.xlu0 %218
    %221 = vst.msk [vmem:[#allocation3] sm:$0xff] %vm96, %v219
    %s222 = scalar_lea.vmem [#allocation2], 8
    %v223 = vld [vmem:[%s222] sm:$0xff]
    %v224 = vpack.c.bf16 %v216, %v216
    %226 = vrot.lane.b32.xlu0 %v224, 32
    %v227 = vpop.permute.xlu0 %226
    %v229 = vsel %vm96, %v227, 0
    %231 = vmatpush.bf16.msra.mxu0 0
    %232 = vmatpush.bf16.msra.mxu0 0
    %233 = vmatpush.bf16.msra.mxu0 0
    %234 = vmatpush.bf16.msra.mxu0 0
    %235 = vmatpush.bf16.msra.mxu0 0
    %236 = vmatpush.bf16.msra.mxu0 0
    %237 = vmatpush.bf16.msra.mxu0 %v160
    %238 = vmatpush.bf16.msra.mxu0 %v159
    %239 = vmatmul.bf16.gmra.mxu0 %v229
    %v240 = vpop.f32.mrf.mxu0
    %v241 = vadd.f32 0.0, %v240
    %v242 = vpop.f32.mrf.mxu0
    %243 = vdwg.mxu0
    %v244 = vadd.f32 %v223, %v241
    %v245 = vxor.u32 %v244, 2147483648
    %v246 = vmul.f32 %v245, 1.442695
    %v247 = vpow.pop %v246
    %v248 = vadd.f32 %v247, 1.0
    %v249 = vrcp.pop %v248
    %v250 = vmul.f32 %v248, %v249
    %v251 = vsub.f32 1.0, %v250
    %v252 = vmul.f32 %v249, %v251
    %v253 = vadd.f32 %v249, %v252
    %vm254 = vweird.f32 %v248
    %vm255 = vweird.f32 %v249
    %vm256 = vmor %vm254, %vm255
    %v257 = vsel %vm256, %v249, %v253
    %v258 = vand.u32 2147483647, %v248
    %vm259 = vcmp.eq.f32.partialorder %v258, 8.507059e+37
    %v260 = vand.u32 %v248, 2147483648
    %v261 = vor.u32 1.1754944e-38, %v260
    %v262 = vsel %vm259, %v261, %v257
    %v263 = vmul.f32 1.0, %v262
    %v264 = vtanh.pop %v244
    %v265 = vmul.f32 %v263, %v210
    %267 = vrot.lane.b32.xlu0 %v264, 64
    %v268 = vpop.permute.xlu0 %267
    %v270 = vmul.f32 %v263, %v268
    %272 = vrot.lane.b32.xlu0 %v270, 32
    %v273 = vpop.permute.xlu0 %272
    %v275 = vadd.f32 %v265, %v273
    %v276 = vtanh.pop %v275
    %278 = vrot.lane.b32.xlu0 %v276, 64
    %v279 = vpop.permute.xlu0 %278
    %v281 = vmul.f32 %v263, %v279
    %283 = vrot.lane.b32.xlu0 %v281, 32
    %v284 = vpop.permute.xlu0 %283
    %s286 = scalar_lea.vmem [#allocation3], 8
    %287 = vst.msk [vmem:[%s286] sm:$0xff] %vm96, %v284
    %s288 = scalar_lea.vmem [#allocation2], 16
    %v289 = vld [vmem:[%s288] sm:$0xff]
    %v290 = vpack.c.bf16 %v281, %v281
    %292 = vrot.lane.b32.xlu0 %v290, 32
    %v293 = vpop.permute.xlu0 %292
    %v295 = vsel %vm96, %v293, 0
    %297 = vmatpush.bf16.msra.mxu0 0
    %298 = vmatpush.bf16.msra.mxu0 0
    %299 = vmatpush.bf16.msra.mxu0 0
    %300 = vmatpush.bf16.msra.mxu0 0
    %301 = vmatpush.bf16.msra.mxu0 0
    %302 = vmatpush.bf16.msra.mxu0 0
    %303 = vmatpush.bf16.msra.mxu0 %v160
    %304 = vmatpush.bf16.msra.mxu0 %v159
    %305 = vmatmul.bf16.gmra.mxu0 %v295
    %v306 = vpop.f32.mrf.mxu0
    %v307 = vadd.f32 0.0, %v306
    %v308 = vpop.f32.mrf.mxu0
    %309 = vdwg.mxu0
    %v310 = vadd.f32 %v289, %v307
    %v311 = vxor.u32 %v310, 2147483648
    %v312 = vmul.f32 %v311, 1.442695
    %v313 = vpow.pop %v312
    %v314 = vadd.f32 %v313, 1.0
    %v315 = vrcp.pop %v314
    %v316 = vmul.f32 %v314, %v315
    %v317 = vsub.f32 1.0, %v316
    %v318 = vmul.f32 %v315, %v317
    %v319 = vadd.f32 %v315, %v318
    %vm320 = vweird.f32 %v314
    %vm321 = vweird.f32 %v315
    %vm322 = vmor %vm320, %vm321
    %v323 = vsel %vm322, %v315, %v319
    %v324 = vand.u32 2147483647, %v314
    %vm325 = vcmp.eq.f32.partialorder %v324, 8.507059e+37
    %v326 = vand.u32 %v314, 2147483648
    %v327 = vor.u32 1.1754944e-38, %v326
    %v328 = vsel %vm325, %v327, %v323
    %v329 = vmul.f32 1.0, %v328
    %v330 = vtanh.pop %v310
    %v331 = vmul.f32 %v329, %v275
    %333 = vrot.lane.b32.xlu0 %v330, 64
    %v334 = vpop.permute.xlu0 %333
    %v336 = vmul.f32 %v329, %v334
    %338 = vrot.lane.b32.xlu0 %v336, 32
    %v339 = vpop.permute.xlu0 %338
    %v341 = vadd.f32 %v331, %v339
    %v342 = vtanh.pop %v341
    %344 = vrot.lane.b32.xlu0 %v342, 64
    %v345 = vpop.permute.xlu0 %344
    %v347 = vmul.f32 %v329, %v345
    %349 = vrot.lane.b32.xlu0 %v347, 32
    %v350 = vpop.permute.xlu0 %349
    %s352 = scalar_lea.vmem [#allocation3], 16
    %353 = vst.msk [vmem:[%s352] sm:$0xff] %vm96, %v350
    %s354 = scalar_lea.vmem [#allocation2], 24
    %v355 = vld [vmem:[%s354] sm:$0xff]
    %v356 = vpack.c.bf16 %v347, %v347
    %358 = vrot.lane.b32.xlu0 %v356, 32
    %v359 = vpop.permute.xlu0 %358
    %v361 = vsel %vm96, %v359, 0
    %363 = vmatpush.bf16.msra.mxu0 0
    %364 = vmatpush.bf16.msra.mxu0 0
    %365 = vmatpush.bf16.msra.mxu0 0
    %366 = vmatpush.bf16.msra.mxu0 0
    %367 = vmatpush.bf16.msra.mxu0 0
    %368 = vmatpush.bf16.msra.mxu0 0
    %369 = vmatpush.bf16.msra.mxu0 %v160
    %370 = vmatpush.bf16.msra.mxu0 %v159
    %371 = vmatmul.bf16.gmra.mxu0 %v361
    %v372 = vpop.f32.mrf.mxu0
    %v373 = vadd.f32 0.0, %v372
    %v374 = vpop.f32.mrf.mxu0
    %375 = vdwg.mxu0
    %v376 = vadd.f32 %v355, %v373
    %v377 = vxor.u32 %v376, 2147483648
    %v378 = vmul.f32 %v377, 1.442695
    %v379 = vpow.pop %v378
    %v380 = vadd.f32 %v379, 1.0
    %v381 = vrcp.pop %v380
    %v382 = vmul.f32 %v380, %v381
    %v383 = vsub.f32 1.0, %v382
    %v384 = vmul.f32 %v381, %v383
    %v385 = vadd.f32 %v381, %v384
    %vm386 = vweird.f32 %v380
    %vm387 = vweird.f32 %v381
    %vm388 = vmor %vm386, %vm387
    %v389 = vsel %vm388, %v381, %v385
    %v390 = vand.u32 2147483647, %v380
    %vm391 = vcmp.eq.f32.partialorder %v390, 8.507059e+37
    %v392 = vand.u32 %v380, 2147483648
    %v393 = vor.u32 1.1754944e-38, %v392
    %v394 = vsel %vm391, %v393, %v389
    %v395 = vmul.f32 1.0, %v394
    %v396 = vtanh.pop %v376
    %v397 = vmul.f32 %v395, %v341
    %399 = vrot.lane.b32.xlu0 %v396, 64
    %v400 = vpop.permute.xlu0 %399
    %v402 = vmul.f32 %v395, %v400
    %404 = vrot.lane.b32.xlu0 %v402, 32
    %v405 = vpop.permute.xlu0 %404
    %v407 = vadd.f32 %v397, %v405
    %v408 = vtanh.pop %v407
    %410 = vrot.lane.b32.xlu0 %v408, 64
    %v411 = vpop.permute.xlu0 %410
    %v413 = vmul.f32 %v395, %v411
    %415 = vrot.lane.b32.xlu0 %v413, 32
    %v416 = vpop.permute.xlu0 %415
    %s418 = scalar_lea.vmem [#allocation3], 24
    %419 = vst.msk [vmem:[%s418] sm:$0xff] %vm96, %v416
    %s420 = scalar_lea.vmem [#allocation2], 32
    %v421 = vld [vmem:[%s420] sm:$0xff]
    %v422 = vpack.c.bf16 %v413, %v413
    %424 = vrot.lane.b32.xlu0 %v422, 32
    %v425 = vpop.permute.xlu0 %424
    %v427 = vsel %vm96, %v425, 0
    %429 = vmatpush.bf16.msra.mxu0 0
    %430 = vmatpush.bf16.msra.mxu0 0
    %431 = vmatpush.bf16.msra.mxu0 0
    %432 = vmatpush.bf16.msra.mxu0 0
    %433 = vmatpush.bf16.msra.mxu0 0
    %434 = vmatpush.bf16.msra.mxu0 0
    %435 = vmatpush.bf16.msra.mxu0 %v160
    %436 = vmatpush.bf16.msra.mxu0 %v159
    %437 = vmatmul.bf16.gmra.mxu0 %v427
    %v438 = vpop.f32.mrf.mxu0
    %v439 = vadd.f32 0.0, %v438
    %v440 = vpop.f32.mrf.mxu0
    %441 = vdwg.mxu0
    %v442 = vadd.f32 %v421, %v439
    %v443 = vxor.u32 %v442, 2147483648
    %v444 = vmul.f32 %v443, 1.442695
    %v445 = vpow.pop %v444
    %v446 = vadd.f32 %v445, 1.0
    %v447 = vrcp.pop %v446
    %v448 = vmul.f32 %v446, %v447
    %v449 = vsub.f32 1.0, %v448
    %v450 = vmul.f32 %v447, %v449
    %v451 = vadd.f32 %v447, %v450
    %vm452 = vweird.f32 %v446
    %vm453 = vweird.f32 %v447
    %vm454 = vmor %vm452, %vm453
    %v455 = vsel %vm454, %v447, %v451
    %v456 = vand.u32 2147483647, %v446
    %vm457 = vcmp.eq.f32.partialorder %v456, 8.507059e+37
    %v458 = vand.u32 %v446, 2147483648
    %v459 = vor.u32 1.1754944e-38, %v458
    %v460 = vsel %vm457, %v459, %v455
    %v461 = vmul.f32 1.0, %v460
    %v462 = vtanh.pop %v442
    %v463 = vmul.f32 %v461, %v407
    %465 = vrot.lane.b32.xlu0 %v462, 64
    %v466 = vpop.permute.xlu0 %465
    %v468 = vmul.f32 %v461, %v466
    %470 = vrot.lane.b32.xlu0 %v468, 32
    %v471 = vpop.permute.xlu0 %470
    %v473 = vadd.f32 %v463, %v471
    %v474 = vtanh.pop %v473
    %476 = vrot.lane.b32.xlu0 %v474, 64
    %v477 = vpop.permute.xlu0 %476
    %v479 = vmul.f32 %v461, %v477
    %481 = vrot.lane.b32.xlu0 %v479, 32
    %v482 = vpop.permute.xlu0 %481
    %s484 = scalar_lea.vmem [#allocation3], 32
    %485 = vst.msk [vmem:[%s484] sm:$0xff] %vm96, %v482
    %s486 = scalar_lea.vmem [#allocation2], 40
    %v487 = vld [vmem:[%s486] sm:$0xff]
    %v488 = vpack.c.bf16 %v479, %v479
    %490 = vrot.lane.b32.xlu0 %v488, 32
    %v491 = vpop.permute.xlu0 %490
    %v493 = vsel %vm96, %v491, 0
    %495 = vmatpush.bf16.msra.mxu0 0
    %496 = vmatpush.bf16.msra.mxu0 0
    %497 = vmatpush.bf16.msra.mxu0 0
    %498 = vmatpush.bf16.msra.mxu0 0
    %499 = vmatpush.bf16.msra.mxu0 0
    %500 = vmatpush.bf16.msra.mxu0 0
    %501 = vmatpush.bf16.msra.mxu0 %v160
    %502 = vmatpush.bf16.msra.mxu0 %v159
    %503 = vmatmul.bf16.gmra.mxu0 %v493
    %v504 = vpop.f32.mrf.mxu0
    %v505 = vadd.f32 0.0, %v504
    %v506 = vpop.f32.mrf.mxu0
    %507 = vdwg.mxu0
    %v508 = vadd.f32 %v487, %v505
    %v509 = vxor.u32 %v508, 2147483648
    %v510 = vmul.f32 %v509, 1.442695
    %v511 = vpow.pop %v510
    %v512 = vadd.f32 %v511, 1.0
    %v513 = vrcp.pop %v512
    %v514 = vmul.f32 %v512, %v513
    %v515 = vsub.f32 1.0, %v514
    %v516 = vmul.f32 %v513, %v515
    %v517 = vadd.f32 %v513, %v516
    %vm518 = vweird.f32 %v512
    %vm519 = vweird.f32 %v513
    %vm520 = vmor %vm518, %vm519
    %v521 = vsel %vm520, %v513, %v517
    %v522 = vand.u32 2147483647, %v512
    %vm523 = vcmp.eq.f32.partialorder %v522, 8.507059e+37
    %v524 = vand.u32 %v512, 2147483648
    %v525 = vor.u32 1.1754944e-38, %v524
    %v526 = vsel %vm523, %v525, %v521
    %v527 = vmul.f32 1.0, %v526
    %v528 = vtanh.pop %v508
    %v529 = vmul.f32 %v527, %v473
    %531 = vrot.lane.b32.xlu0 %v528, 64
    %v532 = vpop.permute.xlu0 %531
    %v534 = vmul.f32 %v527, %v532
    %536 = vrot.lane.b32.xlu0 %v534, 32
    %v537 = vpop.permute.xlu0 %536
    %v539 = vadd.f32 %v529, %v537
    %v540 = vtanh.pop %v539
    %542 = vrot.lane.b32.xlu0 %v540, 64
    %v543 = vpop.permute.xlu0 %542
    %v545 = vmul.f32 %v527, %v543
    %547 = vrot.lane.b32.xlu0 %v545, 32
    %v548 = vpop.permute.xlu0 %547
    %s550 = scalar_lea.vmem [#allocation3], 40
    %551 = vst.msk [vmem:[%s550] sm:$0xff] %vm96, %v548
    %s552 = scalar_lea.vmem [#allocation2], 48
    %v553 = vld [vmem:[%s552] sm:$0xff]
    %v554 = vpack.c.bf16 %v545, %v545
    %556 = vrot.lane.b32.xlu0 %v554, 32
    %v557 = vpop.permute.xlu0 %556
    %v559 = vsel %vm96, %v557, 0
    %561 = vmatpush.bf16.msra.mxu0 0
    %562 = vmatpush.bf16.msra.mxu0 0
    %563 = vmatpush.bf16.msra.mxu0 0
    %564 = vmatpush.bf16.msra.mxu0 0
    %565 = vmatpush.bf16.msra.mxu0 0
    %566 = vmatpush.bf16.msra.mxu0 0
    %567 = vmatpush.bf16.msra.mxu0 %v160
    %568 = vmatpush.bf16.msra.mxu0 %v159
    %569 = vmatmul.bf16.gmra.mxu0 %v559
    %v570 = vpop.f32.mrf.mxu0
    %v571 = vadd.f32 0.0, %v570
    %v572 = vpop.f32.mrf.mxu0
    %573 = vdwg.mxu0
    %v574 = vadd.f32 %v553, %v571
    %v575 = vxor.u32 %v574, 2147483648
    %v576 = vmul.f32 %v575, 1.442695
    %v577 = vpow.pop %v576
    %v578 = vadd.f32 %v577, 1.0
    %v579 = vrcp.pop %v578
    %v580 = vmul.f32 %v578, %v579
    %v581 = vsub.f32 1.0, %v580
    %v582 = vmul.f32 %v579, %v581
    %v583 = vadd.f32 %v579, %v582
    %vm584 = vweird.f32 %v578
    %vm585 = vweird.f32 %v579
    %vm586 = vmor %vm584, %vm585
    %v587 = vsel %vm586, %v579, %v583
    %v588 = vand.u32 2147483647, %v578
    %vm589 = vcmp.eq.f32.partialorder %v588, 8.507059e+37
    %v590 = vand.u32 %v578, 2147483648
    %v591 = vor.u32 1.1754944e-38, %v590
    %v592 = vsel %vm589, %v591, %v587
    %v593 = vmul.f32 1.0, %v592
    %v594 = vtanh.pop %v574
    %v595 = vmul.f32 %v593, %v539
    %597 = vrot.lane.b32.xlu0 %v594, 64
    %v598 = vpop.permute.xlu0 %597
    %v600 = vmul.f32 %v593, %v598
    %602 = vrot.lane.b32.xlu0 %v600, 32
    %v603 = vpop.permute.xlu0 %602
    %v605 = vadd.f32 %v595, %v603
    %v606 = vtanh.pop %v605
    %608 = vrot.lane.b32.xlu0 %v606, 64
    %v609 = vpop.permute.xlu0 %608
    %v611 = vmul.f32 %v593, %v609
    %613 = vrot.lane.b32.xlu0 %v611, 32
    %v614 = vpop.permute.xlu0 %613
    %s616 = scalar_lea.vmem [#allocation3], 48
    %617 = vst.msk [vmem:[%s616] sm:$0xff] %vm96, %v614
    %s618 = scalar_lea.vmem [#allocation2], 56
    %v619 = vld [vmem:[%s618] sm:$0xff]
    %v620 = vpack.c.bf16 %v611, %v611
    %622 = vrot.lane.b32.xlu0 %v620, 32
    %v623 = vpop.permute.xlu0 %622
    %v625 = vsel %vm96, %v623, 0
    %627 = vmatpush.bf16.msra.mxu0 0
    %628 = vmatpush.bf16.msra.mxu0 0
    %629 = vmatpush.bf16.msra.mxu0 0
    %630 = vmatpush.bf16.msra.mxu0 0
    %631 = vmatpush.bf16.msra.mxu0 0
    %632 = vmatpush.bf16.msra.mxu0 0
    %633 = vmatpush.bf16.msra.mxu0 %v160
    %634 = vmatpush.bf16.msra.mxu0 %v159
    %635 = vmatmul.bf16.gmra.mxu0 %v625
    %v636 = vpop.f32.mrf.mxu0
    %v637 = vadd.f32 0.0, %v636
    %v638 = vpop.f32.mrf.mxu0
    %639 = vdwg.mxu0
    %v640 = vadd.f32 %v619, %v637
    %v641 = vxor.u32 %v640, 2147483648
    %v642 = vmul.f32 %v641, 1.442695
    %v643 = vpow.pop %v642
    %v644 = vadd.f32 %v643, 1.0
    %v645 = vrcp.pop %v644
    %v646 = vmul.f32 %v644, %v645
    %v647 = vsub.f32 1.0, %v646
    %v648 = vmul.f32 %v645, %v647
    %v649 = vadd.f32 %v645, %v648
    %vm650 = vweird.f32 %v644
    %vm651 = vweird.f32 %v645
    %vm652 = vmor %vm650, %vm651
    %v653 = vsel %vm652, %v645, %v649
    %v654 = vand.u32 2147483647, %v644
    %vm655 = vcmp.eq.f32.partialorder %v654, 8.507059e+37
    %v656 = vand.u32 %v644, 2147483648
    %v657 = vor.u32 1.1754944e-38, %v656
    %v658 = vsel %vm655, %v657, %v653
    %v659 = vmul.f32 1.0, %v658
    %v660 = vtanh.pop %v640
    %v661 = vmul.f32 %v659, %v605
    %663 = vrot.lane.b32.xlu0 %v660, 64
    %v664 = vpop.permute.xlu0 %663
    %v666 = vmul.f32 %v659, %v664
    %668 = vrot.lane.b32.xlu0 %v666, 32
    %v669 = vpop.permute.xlu0 %668
    %v671 = vadd.f32 %v661, %v669
    %v672 = vtanh.pop %v671
    %674 = vrot.lane.b32.xlu0 %v672, 64
    %v675 = vpop.permute.xlu0 %674
    %v677 = vmul.f32 %v659, %v675
    %679 = vrot.lane.b32.xlu0 %v677, 32
    %v680 = vpop.permute.xlu0 %679
    %s682 = scalar_lea.vmem [#allocation3], 56
    %683 = vst.msk [vmem:[%s682] sm:$0xff] %vm96, %v680
    %v684 = vld [vmem:[#allocation3] sm:$0xff]
    %v685 = vld [vmem:[#allocation3 + $0x8] sm:$0xff]
    %v686 = vld [vmem:[#allocation3 + $0x10] sm:$0xff]
    %v687 = vld [vmem:[#allocation3 + $0x18] sm:$0xff]
    %v688 = vld [vmem:[#allocation3 + $0x20] sm:$0xff]
    %v689 = vld [vmem:[#allocation3 + $0x28] sm:$0xff]
    %v690 = vld [vmem:[#allocation3 + $0x30] sm:$0xff]
    %v691 = vld [vmem:[#allocation3 + $0x38] sm:$0xff]
    %v692 = vpack.c.bf16 %v685, %v684
    %v693 = vpack.c.bf16 %v687, %v686
    %v694 = vpack.c.bf16 %v689, %v688
    %v695 = vpack.c.bf16 %v691, %v690
    %v696 = vld [vmem:[%s4] sm:$0xf]
    %v697 = vld [vmem:[%s4 + $0x4] sm:$0xf]
    %v698 = vld [vmem:[%s4 + $0x8] sm:$0xf]
    %v699 = vld [vmem:[%s4 + $0xc] sm:$0xf]
    %v700 = vld [vmem:[%s6] sm:$0x1]
    %v702 = vperm.slane %v700, 0
    %v708 = vunpack.c.l.b16 %v696
    %v709 = vunpack.c.l.b16 %v697
    %v710 = vunpack.c.l.b16 %v698
    %v711 = vunpack.c.l.b16 %v699
    %v712 = vpack.c.b16 %v709, %v708
    %v713 = vpack.c.b16 %v711, %v710
    %v717 = vsel %vm96, %v692, 0
    %v720 = vsel %vm96, %v693, 0
    %v723 = vsel %vm96, %v694, 0
    %v726 = vsel %vm96, %v695, 0
    %728 = vmatpush.bf16.msra.mxu0 0
    %729 = vmatpush.bf16.msra.mxu0 0
    %730 = vmatpush.bf16.msra.mxu0 0
    %731 = vmatpush.bf16.msra.mxu0 0
    %732 = vmatpush.bf16.msra.mxu0 0
    %733 = vmatpush.bf16.msra.mxu0 0
    %734 = vmatpush.bf16.msra.mxu0 %v713
    %735 = vmatpush.bf16.msra.mxu0 %v712
    %736 = vmatmul.bf16.gmra.mxu0 %v717
    %v737 = vpop.f32.mrf.mxu0
    %v738 = vadd.f32 %v702, %v737
    %v739 = vpop.f32.mrf.mxu0
    %v740 = vadd.f32 %v702, %v739
    %741 = vmatmul.bf16.gmra.mxu0 %v720
    %v742 = vpop.f32.mrf.mxu0
    %v743 = vadd.f32 %v702, %v742
    %v744 = vpop.f32.mrf.mxu0
    %v745 = vadd.f32 %v702, %v744
    %746 = vmatmul.bf16.gmra.mxu0 %v723
    %v747 = vpop.f32.mrf.mxu0
    %v748 = vadd.f32 %v702, %v747
    %v749 = vpop.f32.mrf.mxu0
    %v750 = vadd.f32 %v702, %v749
    %751 = vmatmul.bf16.gmra.mxu0 %v726
    %v752 = vpop.f32.mrf.mxu0
    %v753 = vadd.f32 %v702, %v752
    %v754 = vpop.f32.mrf.mxu0
    %v755 = vadd.f32 %v702, %v754
    %756 = vdwg.mxu0
    %757 = vst [vmem:[#allocation2] sm:$0xff] %v738
    %758 = vst [vmem:[#allocation2 + $0x8] sm:$0xff] %v740
    %759 = vst [vmem:[#allocation2 + $0x10] sm:$0xff] %v743
    %760 = vst [vmem:[#allocation2 + $0x18] sm:$0xff] %v745
    %761 = vst [vmem:[#allocation2 + $0x20] sm:$0xff] %v748
    %762 = vst [vmem:[#allocation2 + $0x28] sm:$0xff] %v750
    %763 = vst [vmem:[#allocation2 + $0x30] sm:$0xff] %v753
    %764 = vst [vmem:[#allocation2 + $0x38] sm:$0xff] %v755
    %v765 = vld [vmem:[#allocation4] sm:$0xf]
    %v766 = vld [vmem:[#allocation4 + $0x4] sm:$0xf]
    %v767 = vld [vmem:[#allocation4 + $0x8] sm:$0xf]
    %v768 = vld [vmem:[#allocation4 + $0xc] sm:$0xf]
    %v769 = vld [vmem:[#allocation2] sm:$0xff]
    %v774 = vunpack.c.l.b16 %v765
    %v775 = vunpack.c.l.b16 %v766
    %v776 = vunpack.c.l.b16 %v767
    %v777 = vunpack.c.l.b16 %v768
    %v778 = vpack.c.b16 %v775, %v774
    %v779 = vpack.c.b16 %v777, %v776
    %782 = vmatpush.bf16.msra.mxu0 0
    %783 = vmatpush.bf16.msra.mxu0 0
    %784 = vmatpush.bf16.msra.mxu0 0
    %785 = vmatpush.bf16.msra.mxu0 0
    %786 = vmatpush.bf16.msra.mxu0 0
    %787 = vmatpush.bf16.msra.mxu0 0
    %788 = vmatpush.bf16.msra.mxu0 %v779
    %789 = vmatpush.bf16.msra.mxu0 %v778
    %790 = vmatmul.bf16.gmra.mxu0 %v164
    %v791 = vpop.f32.mrf.mxu0
    %v792 = vadd.f32 0.0, %v791
    %v793 = vpop.f32.mrf.mxu0
    %794 = vdwg.mxu0
    %v795 = vadd.f32 %v769, %v792
    %v796 = vxor.u32 %v795, 2147483648
    %v797 = vmul.f32 %v796, 1.442695
    %v798 = vpow.pop %v797
    %v799 = vadd.f32 %v798, 1.0
    %v800 = vrcp.pop %v799
    %v801 = vmul.f32 %v799, %v800
    %v802 = vsub.f32 1.0, %v801
    %v803 = vmul.f32 %v800, %v802
    %v804 = vadd.f32 %v800, %v803
    %vm805 = vweird.f32 %v799
    %vm806 = vweird.f32 %v800
    %vm807 = vmor %vm805, %vm806
    %v808 = vsel %vm807, %v800, %v804
    %v809 = vand.u32 2147483647, %v799
    %vm810 = vcmp.eq.f32.partialorder %v809, 8.507059e+37
    %v811 = vand.u32 %v799, 2147483648
    %v812 = vor.u32 1.1754944e-38, %v811
    %v813 = vsel %vm810, %v812, %v808
    %v814 = vmul.f32 1.0, %v813
    %v815 = vtanh.pop %v795
    %v816 = vmul.f32 %v814, 0.0
    %818 = vrot.lane.b32.xlu0 %v815, 64
    %v819 = vpop.permute.xlu0 %818
    %v821 = vmul.f32 %v814, %v819
    %823 = vrot.lane.b32.xlu0 %v821, 32
    %v824 = vpop.permute.xlu0 %823
    %v826 = vadd.f32 %v816, %v824
    %v827 = vtanh.pop %v826
    %829 = vrot.lane.b32.xlu0 %v827, 64
    %v830 = vpop.permute.xlu0 %829
    %v832 = vmul.f32 %v814, %v830
    %834 = vrot.lane.b32.xlu0 %v832, 32
    %v835 = vpop.permute.xlu0 %834
    %837 = vst.msk [vmem:[#allocation7] sm:$0xff] %vm96, %v835
    %v838 = vld [vmem:[%s222] sm:$0xff]
    %v839 = vpack.c.bf16 %v832, %v832
    %841 = vrot.lane.b32.xlu0 %v839, 32
    %v842 = vpop.permute.xlu0 %841
    %v844 = vsel %vm96, %v842, 0
    %846 = vmatpush.bf16.msra.mxu0 0
    %847 = vmatpush.bf16.msra.mxu0 0
    %848 = vmatpush.bf16.msra.mxu0 0
    %849 = vmatpush.bf16.msra.mxu0 0
    %850 = vmatpush.bf16.msra.mxu0 0
    %851 = vmatpush.bf16.msra.mxu0 0
    %852 = vmatpush.bf16.msra.mxu0 %v779
    %853 = vmatpush.bf16.msra.mxu0 %v778
    %854 = vmatmul.bf16.gmra.mxu0 %v844
    %v855 = vpop.f32.mrf.mxu0
    %v856 = vadd.f32 0.0, %v855
    %v857 = vpop.f32.mrf.mxu0
    %858 = vdwg.mxu0
    %v859 = vadd.f32 %v838, %v856
    %v860 = vxor.u32 %v859, 2147483648
    %v861 = vmul.f32 %v860, 1.442695
    %v862 = vpow.pop %v861
    %v863 = vadd.f32 %v862, 1.0
    %v864 = vrcp.pop %v863
    %v865 = vmul.f32 %v863, %v864
    %v866 = vsub.f32 1.0, %v865
    %v867 = vmul.f32 %v864, %v866
    %v868 = vadd.f32 %v864, %v867
    %vm869 = vweird.f32 %v863
    %vm870 = vweird.f32 %v864
    %vm871 = vmor %vm869, %vm870
    %v872 = vsel %vm871, %v864, %v868
    %v873 = vand.u32 2147483647, %v863
    %vm874 = vcmp.eq.f32.partialorder %v873, 8.507059e+37
    %v875 = vand.u32 %v863, 2147483648
    %v876 = vor.u32 1.1754944e-38, %v875
    %v877 = vsel %vm874, %v876, %v872
    %v878 = vmul.f32 1.0, %v877
    %v879 = vtanh.pop %v859
    %v880 = vmul.f32 %v878, %v826
    %882 = vrot.lane.b32.xlu0 %v879, 64
    %v883 = vpop.permute.xlu0 %882
    %v885 = vmul.f32 %v878, %v883
    %887 = vrot.lane.b32.xlu0 %v885, 32
    %v888 = vpop.permute.xlu0 %887
    %v890 = vadd.f32 %v880, %v888
    %v891 = vtanh.pop %v890
    %893 = vrot.lane.b32.xlu0 %v891, 64
    %v894 = vpop.permute.xlu0 %893
    %v896 = vmul.f32 %v878, %v894
    %898 = vrot.lane.b32.xlu0 %v896, 32
    %v899 = vpop.permute.xlu0 %898
    %s901 = scalar_lea.vmem [#allocation7], 8
    %902 = vst.msk [vmem:[%s901] sm:$0xff] %vm96, %v899
    %v903 = vld [vmem:[%s288] sm:$0xff]
    %v904 = vpack.c.bf16 %v896, %v896
    %906 = vrot.lane.b32.xlu0 %v904, 32
    %v907 = vpop.permute.xlu0 %906
    %v909 = vsel %vm96, %v907, 0
    %911 = vmatpush.bf16.msra.mxu0 0
    %912 = vmatpush.bf16.msra.mxu0 0
    %913 = vmatpush.bf16.msra.mxu0 0
    %914 = vmatpush.bf16.msra.mxu0 0
    %915 = vmatpush.bf16.msra.mxu0 0
    %916 = vmatpush.bf16.msra.mxu0 0
    %917 = vmatpush.bf16.msra.mxu0 %v779
    %918 = vmatpush.bf16.msra.mxu0 %v778
    %919 = vmatmul.bf16.gmra.mxu0 %v909
    %v920 = vpop.f32.mrf.mxu0
    %v921 = vadd.f32 0.0, %v920
    %v922 = vpop.f32.mrf.mxu0
    %923 = vdwg.mxu0
    %v924 = vadd.f32 %v903, %v921
    %v925 = vxor.u32 %v924, 2147483648
    %v926 = vmul.f32 %v925, 1.442695
    %v927 = vpow.pop %v926
    %v928 = vadd.f32 %v927, 1.0
    %v929 = vrcp.pop %v928
    %v930 = vmul.f32 %v928, %v929
    %v931 = vsub.f32 1.0, %v930
    %v932 = vmul.f32 %v929, %v931
    %v933 = vadd.f32 %v929, %v932
    %vm934 = vweird.f32 %v928
    %vm935 = vweird.f32 %v929
    %vm936 = vmor %vm934, %vm935
    %v937 = vsel %vm936, %v929, %v933
    %v938 = vand.u32 2147483647, %v928
    %vm939 = vcmp.eq.f32.partialorder %v938, 8.507059e+37
    %v940 = vand.u32 %v928, 2147483648
    %v941 = vor.u32 1.1754944e-38, %v940
    %v942 = vsel %vm939, %v941, %v937
    %v943 = vmul.f32 1.0, %v942
    %v944 = vtanh.pop %v924
    %v945 = vmul.f32 %v943, %v890
    %947 = vrot.lane.b32.xlu0 %v944, 64
    %v948 = vpop.permute.xlu0 %947
    %v950 = vmul.f32 %v943, %v948
    %952 = vrot.lane.b32.xlu0 %v950, 32
    %v953 = vpop.permute.xlu0 %952
    %v955 = vadd.f32 %v945, %v953
    %v956 = vtanh.pop %v955
    %958 = vrot.lane.b32.xlu0 %v956, 64
    %v959 = vpop.permute.xlu0 %958
    %v961 = vmul.f32 %v943, %v959
    %963 = vrot.lane.b32.xlu0 %v961, 32
    %v964 = vpop.permute.xlu0 %963
    %s966 = scalar_lea.vmem [#allocation7], 16
    %967 = vst.msk [vmem:[%s966] sm:$0xff] %vm96, %v964
    %v968 = vld [vmem:[%s354] sm:$0xff]
    %v969 = vpack.c.bf16 %v961, %v961
    %971 = vrot.lane.b32.xlu0 %v969, 32
    %v972 = vpop.permute.xlu0 %971
    %v974 = vsel %vm96, %v972, 0
    %976 = vmatpush.bf16.msra.mxu0 0
    %977 = vmatpush.bf16.msra.mxu0 0
    %978 = vmatpush.bf16.msra.mxu0 0
    %979 = vmatpush.bf16.msra.mxu0 0
    %980 = vmatpush.bf16.msra.mxu0 0
    %981 = vmatpush.bf16.msra.mxu0 0
    %982 = vmatpush.bf16.msra.mxu0 %v779
    %983 = vmatpush.bf16.msra.mxu0 %v778
    %984 = vmatmul.bf16.gmra.mxu0 %v974
    %v985 = vpop.f32.mrf.mxu0
    %v986 = vadd.f32 0.0, %v985
    %v987 = vpop.f32.mrf.mxu0
    %988 = vdwg.mxu0
    %v989 = vadd.f32 %v968, %v986
    %v990 = vxor.u32 %v989, 2147483648
    %v991 = vmul.f32 %v990, 1.442695
    %v992 = vpow.pop %v991
    %v993 = vadd.f32 %v992, 1.0
    %v994 = vrcp.pop %v993
    %v995 = vmul.f32 %v993, %v994
    %v996 = vsub.f32 1.0, %v995
    %v997 = vmul.f32 %v994, %v996
    %v998 = vadd.f32 %v994, %v997
    %vm999 = vweird.f32 %v993
    %vm1000 = vweird.f32 %v994
    %vm1001 = vmor %vm999, %vm1000
    %v1002 = vsel %vm1001, %v994, %v998
    %v1003 = vand.u32 2147483647, %v993
    %vm1004 = vcmp.eq.f32.partialorder %v1003, 8.507059e+37
    %v1005 = vand.u32 %v993, 2147483648
    %v1006 = vor.u32 1.1754944e-38, %v1005
    %v1007 = vsel %vm1004, %v1006, %v1002
    %v1008 = vmul.f32 1.0, %v1007
    %v1009 = vtanh.pop %v989
    %v1010 = vmul.f32 %v1008, %v955
    %1012 = vrot.lane.b32.xlu0 %v1009, 64
    %v1013 = vpop.permute.xlu0 %1012
    %v1015 = vmul.f32 %v1008, %v1013
    %1017 = vrot.lane.b32.xlu0 %v1015, 32
    %v1018 = vpop.permute.xlu0 %1017
    %v1020 = vadd.f32 %v1010, %v1018
    %v1021 = vtanh.pop %v1020
    %1023 = vrot.lane.b32.xlu0 %v1021, 64
    %v1024 = vpop.permute.xlu0 %1023
    %v1026 = vmul.f32 %v1008, %v1024
    %1028 = vrot.lane.b32.xlu0 %v1026, 32
    %v1029 = vpop.permute.xlu0 %1028
    %s1031 = scalar_lea.vmem [#allocation7], 24
    %1032 = vst.msk [vmem:[%s1031] sm:$0xff] %vm96, %v1029
    %v1033 = vld [vmem:[%s420] sm:$0xff]
    %v1034 = vpack.c.bf16 %v1026, %v1026
    %1036 = vrot.lane.b32.xlu0 %v1034, 32
    %v1037 = vpop.permute.xlu0 %1036
    %v1039 = vsel %vm96, %v1037, 0
    %1041 = vmatpush.bf16.msra.mxu0 0
    %1042 = vmatpush.bf16.msra.mxu0 0
    %1043 = vmatpush.bf16.msra.mxu0 0
    %1044 = vmatpush.bf16.msra.mxu0 0
    %1045 = vmatpush.bf16.msra.mxu0 0
    %1046 = vmatpush.bf16.msra.mxu0 0
    %1047 = vmatpush.bf16.msra.mxu0 %v779
    %1048 = vmatpush.bf16.msra.mxu0 %v778
    %1049 = vmatmul.bf16.gmra.mxu0 %v1039
    %v1050 = vpop.f32.mrf.mxu0
    %v1051 = vadd.f32 0.0, %v1050
    %v1052 = vpop.f32.mrf.mxu0
    %1053 = vdwg.mxu0
    %v1054 = vadd.f32 %v1033, %v1051
    %v1055 = vxor.u32 %v1054, 2147483648
    %v1056 = vmul.f32 %v1055, 1.442695
    %v1057 = vpow.pop %v1056
    %v1058 = vadd.f32 %v1057, 1.0
    %v1059 = vrcp.pop %v1058
    %v1060 = vmul.f32 %v1058, %v1059
    %v1061 = vsub.f32 1.0, %v1060
    %v1062 = vmul.f32 %v1059, %v1061
    %v1063 = vadd.f32 %v1059, %v1062
    %vm1064 = vweird.f32 %v1058
    %vm1065 = vweird.f32 %v1059
    %vm1066 = vmor %vm1064, %vm1065
    %v1067 = vsel %vm1066, %v1059, %v1063
    %v1068 = vand.u32 2147483647, %v1058
    %vm1069 = vcmp.eq.f32.partialorder %v1068, 8.507059e+37
    %v1070 = vand.u32 %v1058, 2147483648
    %v1071 = vor.u32 1.1754944e-38, %v1070
    %v1072 = vsel %vm1069, %v1071, %v1067
    %v1073 = vmul.f32 1.0, %v1072
    %v1074 = vtanh.pop %v1054
    %v1075 = vmul.f32 %v1073, %v1020
    %1077 = vrot.lane.b32.xlu0 %v1074, 64
    %v1078 = vpop.permute.xlu0 %1077
    %v1080 = vmul.f32 %v1073, %v1078
    %1082 = vrot.lane.b32.xlu0 %v1080, 32
    %v1083 = vpop.permute.xlu0 %1082
    %v1085 = vadd.f32 %v1075, %v1083
    %v1086 = vtanh.pop %v1085
    %1088 = vrot.lane.b32.xlu0 %v1086, 64
    %v1089 = vpop.permute.xlu0 %1088
    %v1091 = vmul.f32 %v1073, %v1089
    %1093 = vrot.lane.b32.xlu0 %v1091, 32
    %v1094 = vpop.permute.xlu0 %1093
    %s1096 = scalar_lea.vmem [#allocation7], 32
    %1097 = vst.msk [vmem:[%s1096] sm:$0xff] %vm96, %v1094
    %v1098 = vld [vmem:[%s486] sm:$0xff]
    %v1099 = vpack.c.bf16 %v1091, %v1091
    %1101 = vrot.lane.b32.xlu0 %v1099, 32
    %v1102 = vpop.permute.xlu0 %1101
    %v1104 = vsel %vm96, %v1102, 0
    %1106 = vmatpush.bf16.msra.mxu0 0
    %1107 = vmatpush.bf16.msra.mxu0 0
    %1108 = vmatpush.bf16.msra.mxu0 0
    %1109 = vmatpush.bf16.msra.mxu0 0
    %1110 = vmatpush.bf16.msra.mxu0 0
    %1111 = vmatpush.bf16.msra.mxu0 0
    %1112 = vmatpush.bf16.msra.mxu0 %v779
    %1113 = vmatpush.bf16.msra.mxu0 %v778
    %1114 = vmatmul.bf16.gmra.mxu0 %v1104
    %v1115 = vpop.f32.mrf.mxu0
    %v1116 = vadd.f32 0.0, %v1115
    %v1117 = vpop.f32.mrf.mxu0
    %1118 = vdwg.mxu0
    %v1119 = vadd.f32 %v1098, %v1116
    %v1120 = vxor.u32 %v1119, 2147483648
    %v1121 = vmul.f32 %v1120, 1.442695
    %v1122 = vpow.pop %v1121
    %v1123 = vadd.f32 %v1122, 1.0
    %v1124 = vrcp.pop %v1123
    %v1125 = vmul.f32 %v1123, %v1124
    %v1126 = vsub.f32 1.0, %v1125
    %v1127 = vmul.f32 %v1124, %v1126
    %v1128 = vadd.f32 %v1124, %v1127
    %vm1129 = vweird.f32 %v1123
    %vm1130 = vweird.f32 %v1124
    %vm1131 = vmor %vm1129, %vm1130
    %v1132 = vsel %vm1131, %v1124, %v1128
    %v1133 = vand.u32 2147483647, %v1123
    %vm1134 = vcmp.eq.f32.partialorder %v1133, 8.507059e+37
    %v1135 = vand.u32 %v1123, 2147483648
    %v1136 = vor.u32 1.1754944e-38, %v1135
    %v1137 = vsel %vm1134, %v1136, %v1132
    %v1138 = vmul.f32 1.0, %v1137
    %v1139 = vtanh.pop %v1119
    %v1140 = vmul.f32 %v1138, %v1085
    %1142 = vrot.lane.b32.xlu0 %v1139, 64
    %v1143 = vpop.permute.xlu0 %1142
    %v1145 = vmul.f32 %v1138, %v1143
    %1147 = vrot.lane.b32.xlu0 %v1145, 32
    %v1148 = vpop.permute.xlu0 %1147
    %v1150 = vadd.f32 %v1140, %v1148
    %v1151 = vtanh.pop %v1150
    %1153 = vrot.lane.b32.xlu0 %v1151, 64
    %v1154 = vpop.permute.xlu0 %1153
    %v1156 = vmul.f32 %v1138, %v1154
    %1158 = vrot.lane.b32.xlu0 %v1156, 32
    %v1159 = vpop.permute.xlu0 %1158
    %s1161 = scalar_lea.vmem [#allocation7], 40
    %1162 = vst.msk [vmem:[%s1161] sm:$0xff] %vm96, %v1159
    %v1163 = vld [vmem:[%s552] sm:$0xff]
    %v1164 = vpack.c.bf16 %v1156, %v1156
    %1166 = vrot.lane.b32.xlu0 %v1164, 32
    %v1167 = vpop.permute.xlu0 %1166
    %v1169 = vsel %vm96, %v1167, 0
    %1171 = vmatpush.bf16.msra.mxu0 0
    %1172 = vmatpush.bf16.msra.mxu0 0
    %1173 = vmatpush.bf16.msra.mxu0 0
    %1174 = vmatpush.bf16.msra.mxu0 0
    %1175 = vmatpush.bf16.msra.mxu0 0
    %1176 = vmatpush.bf16.msra.mxu0 0
    %1177 = vmatpush.bf16.msra.mxu0 %v779
    %1178 = vmatpush.bf16.msra.mxu0 %v778
    %1179 = vmatmul.bf16.gmra.mxu0 %v1169
    %v1180 = vpop.f32.mrf.mxu0
    %v1181 = vadd.f32 0.0, %v1180
    %v1182 = vpop.f32.mrf.mxu0
    %1183 = vdwg.mxu0
    %v1184 = vadd.f32 %v1163, %v1181
    %v1185 = vxor.u32 %v1184, 2147483648
    %v1186 = vmul.f32 %v1185, 1.442695
    %v1187 = vpow.pop %v1186
    %v1188 = vadd.f32 %v1187, 1.0
    %v1189 = vrcp.pop %v1188
    %v1190 = vmul.f32 %v1188, %v1189
    %v1191 = vsub.f32 1.0, %v1190
    %v1192 = vmul.f32 %v1189, %v1191
    %v1193 = vadd.f32 %v1189, %v1192
    %vm1194 = vweird.f32 %v1188
    %vm1195 = vweird.f32 %v1189
    %vm1196 = vmor %vm1194, %vm1195
    %v1197 = vsel %vm1196, %v1189, %v1193
    %v1198 = vand.u32 2147483647, %v1188
    %vm1199 = vcmp.eq.f32.partialorder %v1198, 8.507059e+37
    %v1200 = vand.u32 %v1188, 2147483648
    %v1201 = vor.u32 1.1754944e-38, %v1200
    %v1202 = vsel %vm1199, %v1201, %v1197
    %v1203 = vmul.f32 1.0, %v1202
    %v1204 = vtanh.pop %v1184
    %v1205 = vmul.f32 %v1203, %v1150
    %1207 = vrot.lane.b32.xlu0 %v1204, 64
    %v1208 = vpop.permute.xlu0 %1207
    %v1210 = vmul.f32 %v1203, %v1208
    %1212 = vrot.lane.b32.xlu0 %v1210, 32
    %v1213 = vpop.permute.xlu0 %1212
    %v1215 = vadd.f32 %v1205, %v1213
    %v1216 = vtanh.pop %v1215
    %1218 = vrot.lane.b32.xlu0 %v1216, 64
    %v1219 = vpop.permute.xlu0 %1218
    %v1221 = vmul.f32 %v1203, %v1219
    %1223 = vrot.lane.b32.xlu0 %v1221, 32
    %v1224 = vpop.permute.xlu0 %1223
    %s1226 = scalar_lea.vmem [#allocation7], 48
    %1227 = vst.msk [vmem:[%s1226] sm:$0xff] %vm96, %v1224
    %v1228 = vld [vmem:[%s618] sm:$0xff]
    %v1229 = vpack.c.bf16 %v1221, %v1221
    %1231 = vrot.lane.b32.xlu0 %v1229, 32
    %v1232 = vpop.permute.xlu0 %1231
    %v1234 = vsel %vm96, %v1232, 0
    %1236 = vmatpush.bf16.msra.mxu0 0
    %1237 = vmatpush.bf16.msra.mxu0 0
    %1238 = vmatpush.bf16.msra.mxu0 0
    %1239 = vmatpush.bf16.msra.mxu0 0
    %1240 = vmatpush.bf16.msra.mxu0 0
    %1241 = vmatpush.bf16.msra.mxu0 0
    %1242 = vmatpush.bf16.msra.mxu0 %v779
    %1243 = vmatpush.bf16.msra.mxu0 %v778
    %1244 = vmatmul.bf16.gmra.mxu0 %v1234
    %v1245 = vpop.f32.mrf.mxu0
    %v1246 = vadd.f32 0.0, %v1245
    %v1247 = vpop.f32.mrf.mxu0
    %1248 = vdwg.mxu0
    %v1249 = vadd.f32 %v1228, %v1246
    %v1250 = vxor.u32 %v1249, 2147483648
    %v1251 = vmul.f32 %v1250, 1.442695
    %v1252 = vpow.pop %v1251
    %v1253 = vadd.f32 %v1252, 1.0
    %v1254 = vrcp.pop %v1253
    %v1255 = vmul.f32 %v1253, %v1254
    %v1256 = vsub.f32 1.0, %v1255
    %v1257 = vmul.f32 %v1254, %v1256
    %v1258 = vadd.f32 %v1254, %v1257
    %vm1259 = vweird.f32 %v1253
    %vm1260 = vweird.f32 %v1254
    %vm1261 = vmor %vm1259, %vm1260
    %v1262 = vsel %vm1261, %v1254, %v1258
    %v1263 = vand.u32 2147483647, %v1253
    %vm1264 = vcmp.eq.f32.partialorder %v1263, 8.507059e+37
    %v1265 = vand.u32 %v1253, 2147483648
    %v1266 = vor.u32 1.1754944e-38, %v1265
    %v1267 = vsel %vm1264, %v1266, %v1262
    %v1268 = vmul.f32 1.0, %v1267
    %v1269 = vtanh.pop %v1249
    %v1270 = vmul.f32 %v1268, %v1215
    %1272 = vrot.lane.b32.xlu0 %v1269, 64
    %v1273 = vpop.permute.xlu0 %1272
    %v1275 = vmul.f32 %v1268, %v1273
    %1277 = vrot.lane.b32.xlu0 %v1275, 32
    %v1278 = vpop.permute.xlu0 %1277
    %v1280 = vadd.f32 %v1270, %v1278
    %v1281 = vtanh.pop %v1280
    %1283 = vrot.lane.b32.xlu0 %v1281, 64
    %v1284 = vpop.permute.xlu0 %1283
    %v1286 = vmul.f32 %v1268, %v1284
    %1288 = vrot.lane.b32.xlu0 %v1286, 32
    %v1289 = vpop.permute.xlu0 %1288
    %s1291 = scalar_lea.vmem [#allocation7], 56
    %1292 = vst.msk [vmem:[%s1291] sm:$0xff] %vm96, %v1289
    %1293 = vst.msk [vmem:[#allocation8] sm:$0xff] %vm96, %v680
    %s1294 = scalar_lea.vmem [#allocation8], 8
    %1295 = vst.msk [vmem:[%s1294] sm:$0xff] %vm96, %v1289
    %1297 = vrot.lane.b32.xlu0 %v671, 96
    %v1298 = vpop.permute.xlu0 %1297
    %1300 = vst.msk [vmem:[#allocation10] sm:$0xff] %vm96, %v1298
    %1302 = vrot.lane.b32.xlu0 %v1280, 96
    %v1303 = vpop.permute.xlu0 %1302
    %s1305 = scalar_lea.vmem [#allocation10], 8
    %1306 = vst.msk [vmem:[%s1305] sm:$0xff] %vm96, %v1303
    // Predicated region
    $region34: #{tpu_custom_call.1} parent=1 // pred_check
      _
    $region35: #{tpu_custom_call.1} parent=1 // pred_check_branch
      %1308 = sbr.rel (0) target = $region37
    $region36: #{tpu_custom_call.1} parent=1 // pred_region
      %1310 = vsyncadd [#allocation6], 0
      %s1311 = sshll.u32 [#allocation7], 4
      %s1312 = int_to_ptr.vmem [resolvable:$true] %s1311
      %s1313 = sshll.u32 %s7, 4
      %s1314 = int_to_ptr.hbm [resolvable:$true] %s1313
      %1319 = dma.vmem_to_hbm [thread:$0]  %s1312, 1024, %s1314, [#allocation6], 128, 128, 8
    $region37: #{tpu_custom_call.1} parent=1 // pred_fallthru
      _
    // Predicated region
    $region38: #{tpu_custom_call.1} parent=1 // pred_check
      _
    $region39: #{tpu_custom_call.1} parent=1 // pred_check_branch
      %1321 = sbr.rel (0) target = $region41
    $region40: #{tpu_custom_call.1} parent=1 // pred_region
      %1323 = vsyncadd [#allocation9], 0
      %s1324 = sshll.u32 [#allocation8], 4
      %s1325 = int_to_ptr.vmem [resolvable:$true] %s1324
      %s1326 = sshll.u32 %s8, 4
      %s1327 = int_to_ptr.hbm [resolvable:$true] %s1326
      %1332 = dma.vmem_to_hbm [thread:$0]  %s1325, 256, %s1327, [#allocation9], 128, 128, 8
    $region41: #{tpu_custom_call.1} parent=1 // pred_fallthru
      _
    // Predicated region
    $region42: #{tpu_custom_call.1} parent=1 // pred_check
      _
    $region43: #{tpu_custom_call.1} parent=1 // pred_check_branch
      %1334 = sbr.rel (0) target = $region45
    $region44: #{tpu_custom_call.1} parent=1 // pred_region
      %1336 = vsyncadd [#allocation9], 0
      %s1337 = sshll.u32 [#allocation10], 4
      %s1338 = int_to_ptr.vmem [resolvable:$true] %s1337
      %s1339 = sshll.u32 %s9, 4
      %s1340 = int_to_ptr.hbm [resolvable:$true] %s1339
      %1345 = dma.vmem_to_hbm [thread:$0]  %s1338, 256, %s1340, [#allocation9], 128, 128, 8
    $region45: #{tpu_custom_call.1} parent=1 // pred_fallthru
      _
    // Predicated region
    $region46: #{tpu_custom_call.1} parent=1 // pred_check
      _
    $region47: #{tpu_custom_call.1} parent=1 // pred_check_branch
      %1347 = sbr.rel (0) target = $region49
    $region48: #{tpu_custom_call.1} parent=1 // pred_region
      %1349 = dma.done [#allocation6], 1024
    $region49: #{tpu_custom_call.1} parent=1 // pred_fallthru
      _
    // Predicated region
    $region50: #{tpu_custom_call.1} parent=1 // pred_check
      _
    $region51: #{tpu_custom_call.1} parent=1 // pred_check_branch
      %1351 = sbr.rel (0) target = $region53
    $region52: #{tpu_custom_call.1} parent=1 // pred_region
      %1353 = dma.done [#allocation9], 256
    $region53: #{tpu_custom_call.1} parent=1 // pred_fallthru
      _
    // Predicated region
    $region54: #{tpu_custom_call.1} parent=1 // pred_check
      _
    $region55: #{tpu_custom_call.1} parent=1 // pred_check_branch
      %1355 = sbr.rel (0) target = $region57
    $region56: #{tpu_custom_call.1} parent=1 // pred_region
      %1357 = dma.done [#allocation9], 256
    $region57: #{tpu_custom_call.1} parent=1 // pred_fallthru
      _
    %1358 = vsyncpa [#allocation5], 1
    %1359 = vsyncpa [#allocation6], 1
    %1360 = vsyncpa [#allocation9], 1

</llo_original>
